<compile_context>
chip_gen: v6e
topology: v6e:2x2x1
jax: 0.10.0
libtpu: 0.0.40
codegen_flags: <defaults>
</compile_context>

<pallas_src>
import functools

import jax
import jax.numpy as jnp
from jax import lax
from jax.experimental import pallas as pl
from jax.experimental.pallas import tpu as pltpu


def _round_up(n, m):
    return ((n + m - 1) // m) * m


def _tensorcores_per_chip():
    """How many TensorCores a 'parallel' grid axis can be sharded across on this chip."""
    try:
        kind = jax.devices()[0].device_kind.lower()
    except Exception:
        return 1
    # v5e / v6e expose a single TensorCore per chip; v7x exposes two.  Default to 1
    # (safe: never serialises extra work on a single-TC chip).
    return 2 if "v7" in kind else 1


def _lstm_encoder_kernel(ids_ref, emb_ref, whh_ref, h_out_ref, c_out_ref,
                         xg_sc, h_sc, c_sc, *, seq_len, time_is_padded, unroll):
    """One (batch_shard, time_chunk) grid step of the fused Embedding+LSTM encoder.

    ids_ref : (Tb*Bs, 1) int32  token ids for this chunk, time-major flattened
    emb_ref : (Vp, 4H)          embedding table pre-projected through W_ih^T, biases and
                                the 0.5 sigmoid pre-scale (i/f/o columns) folded in
    whh_ref : (H, 4H)           W_hh^T with the 0.5 pre-scale folded into i/f/o columns
    h_out_ref, c_out_ref : (Bs, H) f32   final hidden/cell state (written on last chunk)
    xg_sc   : (Tb, Bs, 4H) f32  per-chunk precomputed input-gate contributions
    h_sc, c_sc : (Bs, H) f32    recurrent state carried across time chunks
    """
    chunk = pl.program_id(1)
    n_chunks = pl.num_programs(1)

    Tb, Bs, G = xg_sc.shape          # G == 4*H
    Vp = emb_ref.shape[0]
    H = whh_ref.shape[0]

    @pl.when(chunk == 0)
    def _init():
        h_sc[...] = jnp.zeros_like(h_sc)
        c_sc[...] = jnp.zeros_like(c_sc)

    # ---- Fused "embedding lookup + input projection + bias" for the whole chunk.
    # one_hot(ids) @ (table @ W_ih^T + b)  ==  table[ids] @ W_ih^T + b, as one well-shaped
    # MXU matmul; removes the gather, the (T,B,E) transpose, and takes all of x @ W_ih^T
    # off the serial h-dependence chain.
    ids = ids_ref[...]                                              # (Tb*Bs, 1) i32
    vocab_iota = lax.broadcasted_iota(jnp.int32, (Tb * Bs, Vp), 1)
    onehot = (vocab_iota == ids).astype(emb_ref.dtype)              # (Tb*Bs, Vp)
    xg = jnp.dot(onehot, emb_ref[...], preferred_element_type=jnp.float32)
    xg_sc[...] = xg.reshape(Tb, Bs, G)

    # ---- Serial recurrence over the chunk (the only inherently sequential part).
    whh = whh_ref[...]                                              # hoisted out of the loop
    w_dtype = whh.dtype
    lane = lax.broadcasted_iota(jnp.int32, (Bs, G), 1)
    g_lanes = (lane >= 2 * H) & (lane < 3 * H)                      # lanes of the "g" gate

    def step(t, carry):
        h, c = carry
        gates = xg_sc[t] + jnp.dot(h.astype(w_dtype), whh,
                                   preferred_element_type=jnp.float32)   # (Bs, 4H)
        # The 0.5 sigmoid pre-scale is already folded into the i/f/o weight columns,
        # so ONE full-width EUP tanh pass covers all four gates:
        #   i/f/o lanes hold 0.5*z  ->  sigmoid(z) = 0.5*tanh(0.5*z) + 0.5
        #   g     lanes hold z      ->  tanh(z)
        tz = jnp.tanh(gates)
        act = jnp.where(g_lanes, tz, 0.5 * tz + 0.5)
        # PyTorch gate order (i, f, g, o).  With H=32 these are sub-vreg lane slices;
        # at H>=128 they become whole 128-lane vregs with no cross-lane work.
        i_g = act[:, 0 * H:1 * H]
        f_g = act[:, 1 * H:2 * H]
        g_g = act[:, 2 * H:3 * H]
        o_g = act[:, 3 * H:4 * H]
        c_new = f_g * c + i_g * g_g
        h_new = o_g * jnp.tanh(c_new)
        if time_is_padded:               # static: only emitted when T was padded up
            valid = (chunk * Tb + t) < seq_len
            h_new = jnp.where(valid, h_new, h)
            c_new = jnp.where(valid, c_new, c)
        return h_new, c_new

    h_fin, c_fin = lax.fori_loop(0, Tb, step, (h_sc[...], c_sc[...]), unroll=unroll)
    h_sc[...] = h_fin
    c_sc[...] = c_fin

    @pl.when(chunk == n_chunks - 1)
    def _finalize():
        h_out_ref[...] = h_sc[...]
        c_out_ref[...] = c_sc[...]


def _pick_time_block(T, B_shard, Vp, G, H, emb_itemsize,
                     max_tb=128, budget_bytes=40 * 1024 * 1024):
    """Pick the per-grid-step time chunk so temps/scratch fit a v7x-safe VMEM budget."""
    def estimate(tb):
        xg = tb * B_shard * G * 4                        # xg_sc scratch
        onehot_tmps = 2 * tb * B_shard * Vp * 4          # iota + one-hot temporaries
        weights = 2 * (Vp * G * emb_itemsize + H * G * 4)  # double-buffered weight inputs
        ids = 2 * tb * B_shard * 4
        state = 4 * B_shard * H * 4                      # h/c scratch + outputs
        return xg + onehot_tmps + weights + ids + state

    Tb = max(1, min(T, max_tb))
    while Tb > 8 and estimate(Tb) > budget_bytes:
        Tb = max(8, Tb // 2)
    return Tb, estimate(Tb)


@functools.partial(jax.jit, static_argnames=("hidden_dim", "time_block", "batch_shards"))
def encoder_final_hidden(instructions, emb_gates, whh_t, *, hidden_dim,
                         time_block=128, batch_shards=None):
    """Fused Embedding+LSTM encoder.  instructions: (B, T) int32 token ids.
       emb_gates: (vocab_pad, 4H) pre-projected/pre-scaled table; whh_t: (H, 4H) = scaled W_hh^T.
       Returns (h_n, c_n), each (1, B, H) float32 (PyTorch nn.LSTM final_hidden)."""
    B, T = instructions.shape
    H = hidden_dim
    Vp, G = emb_gates.shape
    assert G == 4 * H and whh_t.shape == (H, G)

    if batch_shards is None:
        # Only shard the batch across TensorCores when the chip actually has two
        # (v7x) AND the batch needs more than one 8-row sublane group; on v5e/v6e
        # a second shard would just re-run the serial recurrence back-to-back.
        batch_shards = 2 if (_tensorcores_per_chip() >= 2 and B > 8) else 1

    # Pad batch rows to full sublane groups of 8 per shard.
    B_shard = _round_up(max(1, -(-B // batch_shards)), 8)
    B_pad = B_shard * batch_shards

    # Chunk time: Tb steps per grid iteration, recurrence looped inside the kernel.
    # Tb is shrunk automatically if the chunk temporaries would blow the VMEM budget
    # (v7x's 64 MiB ceiling is the binding constraint once E/H/vocab scale).
    Tb, vmem_est = _pick_time_block(T, B_shard, Vp, G, H, emb_gates.dtype.itemsize,
                                    max_tb=time_block)
    T_pad = _round_up(T, Tb)
    n_chunks = T_pad // Tb
    vmem_limit = int(min(64 * 1024 * 1024, max(16 * 1024 * 1024, 2 * vmem_est)))

    # Tiny int-only layout prep (a few hundred bytes of ids); the big activation tensor
    # (embedded inputs) never round-trips through HBM -- it is produced in VMEM in-kernel.
    ids = jnp.zeros((B_pad, T_pad), jnp.int32).at[:B, :T].set(instructions.astype(jnp.int32))
    ids = ids.reshape(batch_shards, B_shard, n_chunks, Tb)
    ids = ids.transpose(0, 2, 3, 1).reshape(batch_shards, n_chunks, Tb * B_shard, 1)

    # Wider unroll window lets the scheduler hide xg loads / EUP pops of neighbouring
    # steps under the exposed MXU latency of the serial h-chain.
    unroll = Tb if Tb <= 32 else 32

    kernel = functools.partial(_lstm_encoder_kernel, seq_len=T,
                               time_is_padded=(T_pad != T), unroll=unroll)

    h_pad, c_pad = pl.pallas_call(
        kernel,
        out_shape=(jax.ShapeDtypeStruct((B_pad, H), jnp.float32),
                   jax.ShapeDtypeStruct((B_pad, H), jnp.float32)),
        grid_spec=pltpu.PrefetchScalarGridSpec(
            num_scalar_prefetch=0,
            grid=(batch_shards, n_chunks),
            in_specs=[
                # token ids, time-major, flattened per (shard, chunk)
                pl.BlockSpec((None, None, Tb * B_shard, 1), lambda b, c: (b, c, 0, 0)),
                # pre-projected embedding table (loop-invariant; constant index_map ->
                # fetched once, never refetched)
                pl.BlockSpec((Vp, G), lambda b, c: (0, 0)),
                # W_hh^T (loop-invariant)
                pl.BlockSpec((H, G), lambda b, c: (0, 0)),
            ],
            out_specs=[
                pl.BlockSpec((B_shard, H), lambda b, c: (b, 0)),
                pl.BlockSpec((B_shard, H), lambda b, c: (b, 0)),
            ],
            scratch_shapes=[
                pltpu.VMEM((Tb, B_shard, G), jnp.float32),   # per-chunk x-gate precompute
                pltpu.VMEM((B_shard, H), jnp.float32),       # h_t
                pltpu.VMEM((B_shard, H), jnp.float32),       # c_t
            ],
        ),
        compiler_params=pltpu.CompilerParams(
            dimension_semantics=("parallel", "arbitrary"),
            vmem_limit_bytes=vmem_limit,
        ),
    )(ids, emb_gates, whh_t)

    h_n = h_pad[:B][None, :, :]
    c_n = c_pad[:B][None, :, :]
    return h_n, c_n


class EncoderPallas:
    """Pallas TPU equivalent of the PyTorch Encoder (Embedding + 1-layer LSTM, batch_first)."""

    def __init__(self, embedding_dim, hidden_dim, vocab_size, instructions_joined,
                 key, input_proj_dtype=jnp.float32):
        self.embedding_dim = embedding_dim
        self.hidden_dim = hidden_dim
        self.vocab_size = vocab_size
        self.instructions_joined = instructions_joined

        k_emb, k_wih, k_whh, k_bih, k_bhh = jax.random.split(key, 5)
        # Raw parameters with the same shapes as nn.Embedding / nn.LSTM.
        self.embedding = jax.random.normal(k_emb, (vocab_size, embedding_dim), jnp.float32)
        scale = 1.0 / jnp.sqrt(hidden_dim)
        self.w_ih = scale * jax.random.normal(k_wih, (4 * hidden_dim, embedding_dim), jnp.float32)
        self.w_hh = scale * jax.random.normal(k_whh, (4 * hidden_dim, hidden_dim), jnp.float32)
        self.b_ih = scale * jax.random.normal(k_bih, (4 * hidden_dim,), jnp.float32)
        self.b_hh = scale * jax.random.normal(k_bhh, (4 * hidden_dim,), jnp.float32)

        # One-time, parameter-only packing for the kernel (analogous to a weight transpose):
        #  * pad vocab to a lane multiple (128) so the in-kernel one-hot is lane-dense,
        #  * pre-project the table through W_ih^T and fold in both biases, so a single
        #    in-kernel MXU matmul performs "embedding lookup + input projection + bias",
        #  * fold the 0.5 sigmoid pre-scale (sigmoid(z) = 0.5*tanh(0.5*z)+0.5) into the
        #    i/f/o gate columns of BOTH packs -- exact, and removes one select + one
        #    multiply from every serial timestep inside the kernel.
        H = hidden_dim
        vocab_pad = _round_up(vocab_size, 128)
        table = jnp.zeros((vocab_pad, embedding_dim), jnp.float32).at[:vocab_size].set(self.embedding)
        emb_gates = (jnp.dot(table, self.w_ih.T, precision=lax.Precision.HIGHEST)
                     + (self.b_ih + self.b_hh))                      # (vocab_pad, 4H)
        whh_t = self.w_hh.T                                          # (H, 4H)

        col = jnp.arange(4 * H)
        iofo_cols = (col < 2 * H) | (col >= 3 * H)                   # i, f, o gate columns
        gate_scale = jnp.where(iofo_cols, 0.5, 1.0).astype(jnp.float32)
        emb_gates = emb_gates * gate_scale
        whh_t = whh_t * gate_scale

        # Input-projection pack may be down-cast (bf16 halves its DMA/VMEM and the one-hot
        # is exactly representable); the recurrent pack stays f32 so error on the serial
        # h-chain does not compound.
        self.emb_gates = emb_gates.astype(input_proj_dtype)          # (vocab_pad, 4H)
        self.whh_t = whh_t.astype(jnp.float32)                       # (H, 4H)

    def __call__(self, instructions):
        if self.instructions_joined:
            return self.forward_instructions_joined(instructions)
        return self.forward_instructions_seperate(instructions)

    def forward_instructions_joined(self, instructions):
        # instructions: (B, T) int32 token ids (batch_first, like the PyTorch module).
        return encoder_final_hidden(instructions, self.emb_gates, self.whh_t,
                                    hidden_dim=self.hidden_dim)

    def forward_instructions_seperate(self, instructions):
        # TODO(synk): the original PyTorch forward_instructions_seperate is `pass` (no-op).
        return None


def _reference_lstm(x_tbe, w_ih, w_hh, b_ih, b_hh):
    """Pure-JAX reference (lax.scan) with identical PyTorch LSTM semantics."""
    H = w_hh.shape[1]
    bias = b_ih + b_hh

    def step(carry, x_t):
        h, c = carry
        gates = (jnp.dot(x_t, w_ih.T, precision=lax.Precision.HIGHEST)
                 + jnp.dot(h, w_hh.T, precision=lax.Precision.HIGHEST) + bias)
        i = jax.nn.sigmoid(gates[:, 0 * H:1 * H])
        f = jax.nn.sigmoid(gates[:, 1 * H:2 * H])
        g = jnp.tanh(gates[:, 2 * H:3 * H])
        o = jax.nn.sigmoid(gates[:, 3 * H:4 * H])
        c_new = f * c + i * g
        h_new = o * jnp.tanh(c_new)
        return (h_new, c_new), None

    B = x_tbe.shape[1]
    init = (jnp.zeros((B, H), jnp.float32), jnp.zeros((B, H), jnp.float32))
    (h, c), _ = lax.scan(step, init, x_tbe)
    return h[None], c[None]


if __name__ == "__main__":
    embedding_dim = 32
    hidden_dim = 32
    vocab_size = 50
    batch = 2
    seq_len = 8

    key = jax.random.PRNGKey(0)
    k_params, k_tokens = jax.random.split(key)

    enc = EncoderPallas(embedding_dim, hidden_dim, vocab_size,
                        instructions_joined=True, key=k_params)

    instructions = jax.random.randint(k_tokens, (batch, seq_len), 0, vocab_size,
                                      dtype=jnp.int32)

    h_n, c_n = enc(instructions)
    h_n = jax.block_until_ready(h_n)
    c_n = jax.block_until_ready(c_n)

    # Sanity check against a pure-JAX (lax.scan) reference of Embedding + LSTM.
    embeds = jnp.take(enc.embedding, instructions, axis=0)          # (B, T, E)
    x_tbe = jnp.transpose(embeds, (1, 0, 2))                        # (T, B, E)
    h_ref, c_ref = _reference_lstm(x_tbe, enc.w_ih, enc.w_hh, enc.b_ih, enc.b_hh)

    assert h_n.shape == (1, batch, hidden_dim) and c_n.shape == (1, batch, hidden_dim)
    assert jnp.allclose(h_n, h_ref, atol=1e-4, rtol=1e-4), float(jnp.max(jnp.abs(h_n - h_ref)))
    assert jnp.allclose(c_n, c_ref, atol=1e-4, rtol=1e-4), float(jnp.max(jnp.abs(c_n - c_ref)))

    print("KERNEL_OK")
</pallas_src>

<mosaic_0001>
module attributes {stable_mosaic.version = 11 : i64} {
  func.func @_lstm_encoder_kernel(%arg0: i32, %arg1: i32, %arg2: memref<1x1x64x1xi32, #tpu.memory_space<vmem>>, %arg3: memref<128x128xf32, #tpu.memory_space<vmem>>, %arg4: memref<32x128xf32, #tpu.memory_space<vmem>>, %arg5: memref<8x32xf32, #tpu.memory_space<vmem>>, %arg6: memref<8x32xf32, #tpu.memory_space<vmem>>, %arg7: memref<8x8x128xf32, #tpu.memory_space<vmem>>, %arg8: memref<8x32xf32, #tpu.memory_space<vmem>>, %arg9: memref<8x32xf32, #tpu.memory_space<vmem>>) attributes {dimension_semantics = [#tpu.dimension_semantics<parallel>, #tpu.dimension_semantics<arbitrary>], iteration_bounds = array<i64: 1, 1>, scalar_prefetch = 0 : i64, scratch_operands = 3 : i64, tpu.core_type = #tpu.core_type<tc>, window_params = [{transform_indices = @transform_0, window_bounds = array<i64: 1, 1, 64, 1>}, {pipeline_mode = #tpu.pipeline_mode<synchronous>, transform_indices = @transform_1, window_bounds = array<i64: 128, 128>}, {pipeline_mode = #tpu.pipeline_mode<synchronous>, transform_indices = @transform_2, window_bounds = array<i64: 32, 128>}, {transform_indices = @transform_3, window_bounds = array<i64: 8, 32>}, {transform_indices = @transform_4, window_bounds = array<i64: 8, 32>}]} {
    %c0_i32 = arith.constant 0 : i32
    %0 = arith.cmpi eq, %arg1, %c0_i32 : i32
    %1 = arith.extui %0 : i1 to i32
    %c0_i32_0 = arith.constant 0 : i32
    %2 = arith.cmpi ne, %1, %c0_i32_0 : i32
    scf.if %2 {
      %cst_62 = arith.constant 0.000000e+00 : f32
      %188 = vector.broadcast %cst_62 : f32 to vector<8x32xf32>
      %c0_63 = arith.constant 0 : index
      %c0_64 = arith.constant 0 : index
      %189 = vector.load %arg8[%c0_63, %c0_64] : memref<8x32xf32, #tpu.memory_space<vmem>>, vector<8x32xf32>
      tpu.vector_store %arg8[%c0_63, %c0_64], %188 {strides = array<i32>} : memref<8x32xf32, #tpu.memory_space<vmem>>, vector<8x32xf32>,
      %cst_65 = arith.constant 0.000000e+00 : f32
      %190 = vector.broadcast %cst_65 : f32 to vector<8x32xf32>
      %c0_66 = arith.constant 0 : index
      %c0_67 = arith.constant 0 : index
      %191 = vector.load %arg9[%c0_66, %c0_67] : memref<8x32xf32, #tpu.memory_space<vmem>>, vector<8x32xf32>
      tpu.vector_store %arg9[%c0_66, %c0_67], %190 {strides = array<i32>} : memref<8x32xf32, #tpu.memory_space<vmem>>, vector<8x32xf32>,
    } else {
    }
    %c0 = arith.constant 0 : index
    %c0_1 = arith.constant 0 : index
    %c0_2 = arith.constant 0 : index
    %c0_3 = arith.constant 0 : index
    %3 = vector.load %arg2[%c0, %c0_1, %c0_2, %c0_3] : memref<1x1x64x1xi32, #tpu.memory_space<vmem>>, vector<1x1x64x1xi32>
    %4 = vector.shape_cast %3 : vector<1x1x64x1xi32> to vector<64x1xi32>
    %5 = tpu.iota {dimensions = array<i32: 1>} : vector<64x128xi32>
    %6 = vector.broadcast %4 : vector<64x1xi32> to vector<64x128xi32>
    %7 = arith.cmpi eq, %5, %6 : vector<64x128xi32>
    %8 = arith.extui %7 : vector<64x128xi1> to vector<64x128xi32>
    %9 = arith.sitofp %8 : vector<64x128xi32> to vector<64x128xf32>
    %c0_4 = arith.constant 0 : index
    %c0_5 = arith.constant 0 : index
    %10 = vector.load %arg3[%c0_4, %c0_5] : memref<128x128xf32, #tpu.memory_space<vmem>>, vector<128x128xf32>
    %cst = arith.constant dense<0.000000e+00> : vector<64x128xf32>
    %11 = tpu.matmul %9, %10, %cst {dimension_numbers = #tpu.dot_dimension_numbers<[1], [0], [0], [1], [0, 0, 1, 1], [], []>} : vector<64x128xf32>, vector<128x128xf32>, vector<64x128xf32> -> vector<64x128xf32>
    %12 = vector.shape_cast %11 : vector<64x128xf32> to vector<8x8x128xf32>
    %c0_6 = arith.constant 0 : index
    %c0_7 = arith.constant 0 : index
    %c0_8 = arith.constant 0 : index
    %13 = vector.load %arg7[%c0_6, %c0_7, %c0_8] : memref<8x8x128xf32, #tpu.memory_space<vmem>>, vector<8x8x128xf32>
    tpu.vector_store %arg7[%c0_6, %c0_7, %c0_8], %12 {strides = array<i32>} : memref<8x8x128xf32, #tpu.memory_space<vmem>>, vector<8x8x128xf32>,
    %c0_9 = arith.constant 0 : index
    %c0_10 = arith.constant 0 : index
    %14 = vector.load %arg4[%c0_9, %c0_10] : memref<32x128xf32, #tpu.memory_space<vmem>>, vector<32x128xf32>
    %15 = tpu.iota {dimensions = array<i32: 1>} : vector<8x128xi32>
    %c64_i32 = arith.constant 64 : i32
    %16 = vector.broadcast %c64_i32 : i32 to vector<8x128xi32>
    %17 = arith.cmpi sge, %15, %16 : vector<8x128xi32>
    %c96_i32 = arith.constant 96 : i32
    %18 = vector.broadcast %c96_i32 : i32 to vector<8x128xi32>
    %19 = arith.cmpi slt, %15, %18 : vector<8x128xi32>
    %20 = arith.andi %17, %19 : vector<8x128xi1>
    %c0_11 = arith.constant 0 : index
    %c0_12 = arith.constant 0 : index
    %21 = vector.load %arg8[%c0_11, %c0_12] : memref<8x32xf32, #tpu.memory_space<vmem>>, vector<8x32xf32>
    %c0_13 = arith.constant 0 : index
    %c0_14 = arith.constant 0 : index
    %22 = vector.load %arg9[%c0_13, %c0_14] : memref<8x32xf32, #tpu.memory_space<vmem>>, vector<8x32xf32>
    %c0_i32_15 = arith.constant 0 : i32
    %23 = arith.index_cast %c0_i32_15 : i32 to index
    %c0_16 = arith.constant 0 : index
    %c0_17 = arith.constant 0 : index
    %24 = vector.load %arg7[%23, %c0_16, %c0_17] : memref<8x8x128xf32, #tpu.memory_space<vmem>>, vector<1x8x128xf32>
    %25 = vector.shape_cast %24 : vector<1x8x128xf32> to vector<8x128xf32>
    %cst_18 = arith.constant dense<0.000000e+00> : vector<8x128xf32>
    %26 = tpu.matmul %21, %14, %cst_18 {dimension_numbers = #tpu.dot_dimension_numbers<[1], [0], [0], [1], [0, 0, 1, 1], [], []>} : vector<8x32xf32>, vector<32x128xf32>, vector<8x128xf32> -> vector<8x128xf32>
    %27 = arith.addf %25, %26 : vector<8x128xf32>
    %28 = math.tanh %27 : vector<8x128xf32>
    %cst_19 = arith.constant 5.000000e-01 : f32
    %29 = vector.broadcast %cst_19 : f32 to vector<8x128xf32>
    %30 = arith.mulf %29, %28 : vector<8x128xf32>
    %cst_20 = arith.constant 5.000000e-01 : f32
    %31 = vector.broadcast %cst_20 : f32 to vector<8x128xf32>
    %32 = arith.addf %30, %31 : vector<8x128xf32>
    %33 = arith.select %20, %28, %32 : vector<8x128xi1>, vector<8x128xf32>
    %34 = vector.extract_strided_slice %33 {offsets = [0, 0], sizes = [8, 32], strides = [1, 1]} : vector<8x128xf32> to vector<8x32xf32>
    %35 = vector.extract_strided_slice %33 {offsets = [0, 32], sizes = [8, 32], strides = [1, 1]} : vector<8x128xf32> to vector<8x32xf32>
    %36 = vector.extract_strided_slice %33 {offsets = [0, 64], sizes = [8, 32], strides = [1, 1]} : vector<8x128xf32> to vector<8x32xf32>
    %37 = vector.extract_strided_slice %33 {offsets = [0, 96], sizes = [8, 32], strides = [1, 1]} : vector<8x128xf32> to vector<8x32xf32>
    %38 = arith.mulf %35, %22 : vector<8x32xf32>
    %39 = arith.mulf %34, %36 : vector<8x32xf32>
    %40 = arith.addf %38, %39 : vector<8x32xf32>
    %41 = math.tanh %40 : vector<8x32xf32>
    %42 = arith.mulf %37, %41 : vector<8x32xf32>
    %c1_i32 = arith.constant 1 : i32
    %43 = arith.index_cast %c1_i32 : i32 to index
    %c0_21 = arith.constant 0 : index
    %c0_22 = arith.constant 0 : index
    %44 = vector.load %arg7[%43, %c0_21, %c0_22] : memref<8x8x128xf32, #tpu.memory_space<vmem>>, vector<1x8x128xf32>
    %45 = vector.shape_cast %44 : vector<1x8x128xf32> to vector<8x128xf32>
    %cst_23 = arith.constant dense<0.000000e+00> : vector<8x128xf32>
    %46 = tpu.matmul %42, %14, %cst_23 {dimension_numbers = #tpu.dot_dimension_numbers<[1], [0], [0], [1], [0, 0, 1, 1], [], []>} : vector<8x32xf32>, vector<32x128xf32>, vector<8x128xf32> -> vector<8x128xf32>
    %47 = arith.addf %45, %46 : vector<8x128xf32>
    %48 = math.tanh %47 : vector<8x128xf32>
    %cst_24 = arith.constant 5.000000e-01 : f32
    %49 = vector.broadcast %cst_24 : f32 to vector<8x128xf32>
    %50 = arith.mulf %49, %48 : vector<8x128xf32>
    %cst_25 = arith.constant 5.000000e-01 : f32
    %51 = vector.broadcast %cst_25 : f32 to vector<8x128xf32>
    %52 = arith.addf %50, %51 : vector<8x128xf32>
    %53 = arith.select %20, %48, %52 : vector<8x128xi1>, vector<8x128xf32>
    %54 = vector.extract_strided_slice %53 {offsets = [0, 0], sizes = [8, 32], strides = [1, 1]} : vector<8x128xf32> to vector<8x32xf32>
    %55 = vector.extract_strided_slice %53 {offsets = [0, 32], sizes = [8, 32], strides = [1, 1]} : vector<8x128xf32> to vector<8x32xf32>
    %56 = vector.extract_strided_slice %53 {offsets = [0, 64], sizes = [8, 32], strides = [1, 1]} : vector<8x128xf32> to vector<8x32xf32>
    %57 = vector.extract_strided_slice %53 {offsets = [0, 96], sizes = [8, 32], strides = [1, 1]} : vector<8x128xf32> to vector<8x32xf32>
    %58 = arith.mulf %55, %40 : vector<8x32xf32>
    %59 = arith.mulf %54, %56 : vector<8x32xf32>
    %60 = arith.addf %58, %59 : vector<8x32xf32>
    %61 = math.tanh %60 : vector<8x32xf32>
    %62 = arith.mulf %57, %61 : vector<8x32xf32>
    %c2_i32 = arith.constant 2 : i32
    %63 = arith.index_cast %c2_i32 : i32 to index
    %c0_26 = arith.constant 0 : index
    %c0_27 = arith.constant 0 : index
    %64 = vector.load %arg7[%63, %c0_26, %c0_27] : memref<8x8x128xf32, #tpu.memory_space<vmem>>, vector<1x8x128xf32>
    %65 = vector.shape_cast %64 : vector<1x8x128xf32> to vector<8x128xf32>
    %cst_28 = arith.constant dense<0.000000e+00> : vector<8x128xf32>
    %66 = tpu.matmul %62, %14, %cst_28 {dimension_numbers = #tpu.dot_dimension_numbers<[1], [0], [0], [1], [0, 0, 1, 1], [], []>} : vector<8x32xf32>, vector<32x128xf32>, vector<8x128xf32> -> vector<8x128xf32>
    %67 = arith.addf %65, %66 : vector<8x128xf32>
    %68 = math.tanh %67 : vector<8x128xf32>
    %cst_29 = arith.constant 5.000000e-01 : f32
    %69 = vector.broadcast %cst_29 : f32 to vector<8x128xf32>
    %70 = arith.mulf %69, %68 : vector<8x128xf32>
    %cst_30 = arith.constant 5.000000e-01 : f32
    %71 = vector.broadcast %cst_30 : f32 to vector<8x128xf32>
    %72 = arith.addf %70, %71 : vector<8x128xf32>
    %73 = arith.select %20, %68, %72 : vector<8x128xi1>, vector<8x128xf32>
    %74 = vector.extract_strided_slice %73 {offsets = [0, 0], sizes = [8, 32], strides = [1, 1]} : vector<8x128xf32> to vector<8x32xf32>
    %75 = vector.extract_strided_slice %73 {offsets = [0, 32], sizes = [8, 32], strides = [1, 1]} : vector<8x128xf32> to vector<8x32xf32>
    %76 = vector.extract_strided_slice %73 {offsets = [0, 64], sizes = [8, 32], strides = [1, 1]} : vector<8x128xf32> to vector<8x32xf32>
    %77 = vector.extract_strided_slice %73 {offsets = [0, 96], sizes = [8, 32], strides = [1, 1]} : vector<8x128xf32> to vector<8x32xf32>
    %78 = arith.mulf %75, %60 : vector<8x32xf32>
    %79 = arith.mulf %74, %76 : vector<8x32xf32>
    %80 = arith.addf %78, %79 : vector<8x32xf32>
    %81 = math.tanh %80 : vector<8x32xf32>
    %82 = arith.mulf %77, %81 : vector<8x32xf32>
    %c3_i32 = arith.constant 3 : i32
    %83 = arith.index_cast %c3_i32 : i32 to index
    %c0_31 = arith.constant 0 : index
    %c0_32 = arith.constant 0 : index
    %84 = vector.load %arg7[%83, %c0_31, %c0_32] : memref<8x8x128xf32, #tpu.memory_space<vmem>>, vector<1x8x128xf32>
    %85 = vector.shape_cast %84 : vector<1x8x128xf32> to vector<8x128xf32>
    %cst_33 = arith.constant dense<0.000000e+00> : vector<8x128xf32>
    %86 = tpu.matmul %82, %14, %cst_33 {dimension_numbers = #tpu.dot_dimension_numbers<[1], [0], [0], [1], [0, 0, 1, 1], [], []>} : vector<8x32xf32>, vector<32x128xf32>, vector<8x128xf32> -> vector<8x128xf32>
    %87 = arith.addf %85, %86 : vector<8x128xf32>
    %88 = math.tanh %87 : vector<8x128xf32>
    %cst_34 = arith.constant 5.000000e-01 : f32
    %89 = vector.broadcast %cst_34 : f32 to vector<8x128xf32>
    %90 = arith.mulf %89, %88 : vector<8x128xf32>
    %cst_35 = arith.constant 5.000000e-01 : f32
    %91 = vector.broadcast %cst_35 : f32 to vector<8x128xf32>
    %92 = arith.addf %90, %91 : vector<8x128xf32>
    %93 = arith.select %20, %88, %92 : vector<8x128xi1>, vector<8x128xf32>
    %94 = vector.extract_strided_slice %93 {offsets = [0, 0], sizes = [8, 32], strides = [1, 1]} : vector<8x128xf32> to vector<8x32xf32>
    %95 = vector.extract_strided_slice %93 {offsets = [0, 32], sizes = [8, 32], strides = [1, 1]} : vector<8x128xf32> to vector<8x32xf32>
    %96 = vector.extract_strided_slice %93 {offsets = [0, 64], sizes = [8, 32], strides = [1, 1]} : vector<8x128xf32> to vector<8x32xf32>
    %97 = vector.extract_strided_slice %93 {offsets = [0, 96], sizes = [8, 32], strides = [1, 1]} : vector<8x128xf32> to vector<8x32xf32>
    %98 = arith.mulf %95, %80 : vector<8x32xf32>
    %99 = arith.mulf %94, %96 : vector<8x32xf32>
    %100 = arith.addf %98, %99 : vector<8x32xf32>
    %101 = math.tanh %100 : vector<8x32xf32>
    %102 = arith.mulf %97, %101 : vector<8x32xf32>
    %c4_i32 = arith.constant 4 : i32
    %103 = arith.index_cast %c4_i32 : i32 to index
    %c0_36 = arith.constant 0 : index
    %c0_37 = arith.constant 0 : index
    %104 = vector.load %arg7[%103, %c0_36, %c0_37] : memref<8x8x128xf32, #tpu.memory_space<vmem>>, vector<1x8x128xf32>
    %105 = vector.shape_cast %104 : vector<1x8x128xf32> to vector<8x128xf32>
    %cst_38 = arith.constant dense<0.000000e+00> : vector<8x128xf32>
    %106 = tpu.matmul %102, %14, %cst_38 {dimension_numbers = #tpu.dot_dimension_numbers<[1], [0], [0], [1], [0, 0, 1, 1], [], []>} : vector<8x32xf32>, vector<32x128xf32>, vector<8x128xf32> -> vector<8x128xf32>
    %107 = arith.addf %105, %106 : vector<8x128xf32>
    %108 = math.tanh %107 : vector<8x128xf32>
    %cst_39 = arith.constant 5.000000e-01 : f32
    %109 = vector.broadcast %cst_39 : f32 to vector<8x128xf32>
    %110 = arith.mulf %109, %108 : vector<8x128xf32>
    %cst_40 = arith.constant 5.000000e-01 : f32
    %111 = vector.broadcast %cst_40 : f32 to vector<8x128xf32>
    %112 = arith.addf %110, %111 : vector<8x128xf32>
    %113 = arith.select %20, %108, %112 : vector<8x128xi1>, vector<8x128xf32>
    %114 = vector.extract_strided_slice %113 {offsets = [0, 0], sizes = [8, 32], strides = [1, 1]} : vector<8x128xf32> to vector<8x32xf32>
    %115 = vector.extract_strided_slice %113 {offsets = [0, 32], sizes = [8, 32], strides = [1, 1]} : vector<8x128xf32> to vector<8x32xf32>
    %116 = vector.extract_strided_slice %113 {offsets = [0, 64], sizes = [8, 32], strides = [1, 1]} : vector<8x128xf32> to vector<8x32xf32>
    %117 = vector.extract_strided_slice %113 {offsets = [0, 96], sizes = [8, 32], strides = [1, 1]} : vector<8x128xf32> to vector<8x32xf32>
    %118 = arith.mulf %115, %100 : vector<8x32xf32>
    %119 = arith.mulf %114, %116 : vector<8x32xf32>
    %120 = arith.addf %118, %119 : vector<8x32xf32>
    %121 = math.tanh %120 : vector<8x32xf32>
    %122 = arith.mulf %117, %121 : vector<8x32xf32>
    %c5_i32 = arith.constant 5 : i32
    %123 = arith.index_cast %c5_i32 : i32 to index
    %c0_41 = arith.constant 0 : index
    %c0_42 = arith.constant 0 : index
    %124 = vector.load %arg7[%123, %c0_41, %c0_42] : memref<8x8x128xf32, #tpu.memory_space<vmem>>, vector<1x8x128xf32>
    %125 = vector.shape_cast %124 : vector<1x8x128xf32> to vector<8x128xf32>
    %cst_43 = arith.constant dense<0.000000e+00> : vector<8x128xf32>
    %126 = tpu.matmul %122, %14, %cst_43 {dimension_numbers = #tpu.dot_dimension_numbers<[1], [0], [0], [1], [0, 0, 1, 1], [], []>} : vector<8x32xf32>, vector<32x128xf32>, vector<8x128xf32> -> vector<8x128xf32>
    %127 = arith.addf %125, %126 : vector<8x128xf32>
    %128 = math.tanh %127 : vector<8x128xf32>
    %cst_44 = arith.constant 5.000000e-01 : f32
    %129 = vector.broadcast %cst_44 : f32 to vector<8x128xf32>
    %130 = arith.mulf %129, %128 : vector<8x128xf32>
    %cst_45 = arith.constant 5.000000e-01 : f32
    %131 = vector.broadcast %cst_45 : f32 to vector<8x128xf32>
    %132 = arith.addf %130, %131 : vector<8x128xf32>
    %133 = arith.select %20, %128, %132 : vector<8x128xi1>, vector<8x128xf32>
    %134 = vector.extract_strided_slice %133 {offsets = [0, 0], sizes = [8, 32], strides = [1, 1]} : vector<8x128xf32> to vector<8x32xf32>
    %135 = vector.extract_strided_slice %133 {offsets = [0, 32], sizes = [8, 32], strides = [1, 1]} : vector<8x128xf32> to vector<8x32xf32>
    %136 = vector.extract_strided_slice %133 {offsets = [0, 64], sizes = [8, 32], strides = [1, 1]} : vector<8x128xf32> to vector<8x32xf32>
    %137 = vector.extract_strided_slice %133 {offsets = [0, 96], sizes = [8, 32], strides = [1, 1]} : vector<8x128xf32> to vector<8x32xf32>
    %138 = arith.mulf %135, %120 : vector<8x32xf32>
    %139 = arith.mulf %134, %136 : vector<8x32xf32>
    %140 = arith.addf %138, %139 : vector<8x32xf32>
    %141 = math.tanh %140 : vector<8x32xf32>
    %142 = arith.mulf %137, %141 : vector<8x32xf32>
    %c6_i32 = arith.constant 6 : i32
    %143 = arith.index_cast %c6_i32 : i32 to index
    %c0_46 = arith.constant 0 : index
    %c0_47 = arith.constant 0 : index
    %144 = vector.load %arg7[%143, %c0_46, %c0_47] : memref<8x8x128xf32, #tpu.memory_space<vmem>>, vector<1x8x128xf32>
    %145 = vector.shape_cast %144 : vector<1x8x128xf32> to vector<8x128xf32>
    %cst_48 = arith.constant dense<0.000000e+00> : vector<8x128xf32>
    %146 = tpu.matmul %142, %14, %cst_48 {dimension_numbers = #tpu.dot_dimension_numbers<[1], [0], [0], [1], [0, 0, 1, 1], [], []>} : vector<8x32xf32>, vector<32x128xf32>, vector<8x128xf32> -> vector<8x128xf32>
    %147 = arith.addf %145, %146 : vector<8x128xf32>
    %148 = math.tanh %147 : vector<8x128xf32>
    %cst_49 = arith.constant 5.000000e-01 : f32
    %149 = vector.broadcast %cst_49 : f32 to vector<8x128xf32>
    %150 = arith.mulf %149, %148 : vector<8x128xf32>
    %cst_50 = arith.constant 5.000000e-01 : f32
    %151 = vector.broadcast %cst_50 : f32 to vector<8x128xf32>
    %152 = arith.addf %150, %151 : vector<8x128xf32>
    %153 = arith.select %20, %148, %152 : vector<8x128xi1>, vector<8x128xf32>
    %154 = vector.extract_strided_slice %153 {offsets = [0, 0], sizes = [8, 32], strides = [1, 1]} : vector<8x128xf32> to vector<8x32xf32>
    %155 = vector.extract_strided_slice %153 {offsets = [0, 32], sizes = [8, 32], strides = [1, 1]} : vector<8x128xf32> to vector<8x32xf32>
    %156 = vector.extract_strided_slice %153 {offsets = [0, 64], sizes = [8, 32], strides = [1, 1]} : vector<8x128xf32> to vector<8x32xf32>
    %157 = vector.extract_strided_slice %153 {offsets = [0, 96], sizes = [8, 32], strides = [1, 1]} : vector<8x128xf32> to vector<8x32xf32>
    %158 = arith.mulf %155, %140 : vector<8x32xf32>
    %159 = arith.mulf %154, %156 : vector<8x32xf32>
    %160 = arith.addf %158, %159 : vector<8x32xf32>
    %161 = math.tanh %160 : vector<8x32xf32>
    %162 = arith.mulf %157, %161 : vector<8x32xf32>
    %c7_i32 = arith.constant 7 : i32
    %163 = arith.index_cast %c7_i32 : i32 to index
    %c0_51 = arith.constant 0 : index
    %c0_52 = arith.constant 0 : index
    %164 = vector.load %arg7[%163, %c0_51, %c0_52] : memref<8x8x128xf32, #tpu.memory_space<vmem>>, vector<1x8x128xf32>
    %165 = vector.shape_cast %164 : vector<1x8x128xf32> to vector<8x128xf32>
    %cst_53 = arith.constant dense<0.000000e+00> : vector<8x128xf32>
    %166 = tpu.matmul %162, %14, %cst_53 {dimension_numbers = #tpu.dot_dimension_numbers<[1], [0], [0], [1], [0, 0, 1, 1], [], []>} : vector<8x32xf32>, vector<32x128xf32>, vector<8x128xf32> -> vector<8x128xf32>
    %167 = arith.addf %165, %166 : vector<8x128xf32>
    %168 = math.tanh %167 : vector<8x128xf32>
    %cst_54 = arith.constant 5.000000e-01 : f32
    %169 = vector.broadcast %cst_54 : f32 to vector<8x128xf32>
    %170 = arith.mulf %169, %168 : vector<8x128xf32>
    %cst_55 = arith.constant 5.000000e-01 : f32
    %171 = vector.broadcast %cst_55 : f32 to vector<8x128xf32>
    %172 = arith.addf %170, %171 : vector<8x128xf32>
    %173 = arith.select %20, %168, %172 : vector<8x128xi1>, vector<8x128xf32>
    %174 = vector.extract_strided_slice %173 {offsets = [0, 0], sizes = [8, 32], strides = [1, 1]} : vector<8x128xf32> to vector<8x32xf32>
    %175 = vector.extract_strided_slice %173 {offsets = [0, 32], sizes = [8, 32], strides = [1, 1]} : vector<8x128xf32> to vector<8x32xf32>
    %176 = vector.extract_strided_slice %173 {offsets = [0, 64], sizes = [8, 32], strides = [1, 1]} : vector<8x128xf32> to vector<8x32xf32>
    %177 = vector.extract_strided_slice %173 {offsets = [0, 96], sizes = [8, 32], strides = [1, 1]} : vector<8x128xf32> to vector<8x32xf32>
    %178 = arith.mulf %175, %160 : vector<8x32xf32>
    %179 = arith.mulf %174, %176 : vector<8x32xf32>
    %180 = arith.addf %178, %179 : vector<8x32xf32>
    %181 = math.tanh %180 : vector<8x32xf32>
    %182 = arith.mulf %177, %181 : vector<8x32xf32>
    %c8_i32 = arith.constant 8 : i32
    %c0_56 = arith.constant 0 : index
    %c0_57 = arith.constant 0 : index
    %183 = vector.load %arg8[%c0_56, %c0_57] : memref<8x32xf32, #tpu.memory_space<vmem>>, vector<8x32xf32>
    tpu.vector_store %arg8[%c0_56, %c0_57], %182 {strides = array<i32>} : memref<8x32xf32, #tpu.memory_space<vmem>>, vector<8x32xf32>,
    %c0_58 = arith.constant 0 : index
    %c0_59 = arith.constant 0 : index
    %184 = vector.load %arg9[%c0_58, %c0_59] : memref<8x32xf32, #tpu.memory_space<vmem>>, vector<8x32xf32>
    tpu.vector_store %arg9[%c0_58, %c0_59], %180 {strides = array<i32>} : memref<8x32xf32, #tpu.memory_space<vmem>>, vector<8x32xf32>,
    %c0_i32_60 = arith.constant 0 : i32
    %185 = arith.cmpi eq, %arg1, %c0_i32_60 : i32
    %186 = arith.extui %185 : i1 to i32
    %c0_i32_61 = arith.constant 0 : i32
    %187 = arith.cmpi ne, %186, %c0_i32_61 : i32
    scf.if %187 {
      %c0_62 = arith.constant 0 : index
      %c0_63 = arith.constant 0 : index
      %188 = vector.load %arg8[%c0_62, %c0_63] : memref<8x32xf32, #tpu.memory_space<vmem>>, vector<8x32xf32>
      %c0_64 = arith.constant 0 : index
      %c0_65 = arith.constant 0 : index
      %189 = vector.load %arg5[%c0_64, %c0_65] : memref<8x32xf32, #tpu.memory_space<vmem>>, vector<8x32xf32>
      tpu.vector_store %arg5[%c0_64, %c0_65], %188 {strides = array<i32>} : memref<8x32xf32, #tpu.memory_space<vmem>>, vector<8x32xf32>,
      %c0_66 = arith.constant 0 : index
      %c0_67 = arith.constant 0 : index
      %190 = vector.load %arg9[%c0_66, %c0_67] : memref<8x32xf32, #tpu.memory_space<vmem>>, vector<8x32xf32>
      %c0_68 = arith.constant 0 : index
      %c0_69 = arith.constant 0 : index
      %191 = vector.load %arg6[%c0_68, %c0_69] : memref<8x32xf32, #tpu.memory_space<vmem>>, vector<8x32xf32>
      tpu.vector_store %arg6[%c0_68, %c0_69], %190 {strides = array<i32>} : memref<8x32xf32, #tpu.memory_space<vmem>>, vector<8x32xf32>,
    } else {
    }
    return
  }
  func.func @transform_0(%arg0: i32, %arg1: i32) -> (i32, i32, i32, i32) {
    %c0_i32 = arith.constant 0 : i32
    %c0_i32_0 = arith.constant 0 : i32
    %c0_i32_1 = arith.constant 0 : i32
    return %arg0, %arg1, %c0_i32, %c0_i32_0 : i32, i32, i32, i32
  }
  func.func @transform_1(%arg0: i32, %arg1: i32) -> (i32, i32) {
    %c0_i32 = arith.constant 0 : i32
    %c0_i32_0 = arith.constant 0 : i32
    %c0_i32_1 = arith.constant 0 : i32
    return %c0_i32, %c0_i32_0 : i32, i32
  }
  func.func @transform_2(%arg0: i32, %arg1: i32) -> (i32, i32) {
    %c0_i32 = arith.constant 0 : i32
    %c0_i32_0 = arith.constant 0 : i32
    %c0_i32_1 = arith.constant 0 : i32
    return %c0_i32, %c0_i32_0 : i32, i32
  }
  func.func @transform_3(%arg0: i32, %arg1: i32) -> (i32, i32) {
    %c0_i32 = arith.constant 0 : i32
    %c0_i32_0 = arith.constant 0 : i32
    return %arg0, %c0_i32 : i32, i32
  }
  func.func @transform_4(%arg0: i32, %arg1: i32) -> (i32, i32) {
    %c0_i32 = arith.constant 0 : i32
    %c0_i32_0 = arith.constant 0 : i32
    return %arg0, %c0_i32 : i32, i32
  }
}

</mosaic_0001>

<llo_original>
// kernel: encoder_final_hidden.1
$region0: #{encoder_final_hidden.1}
  #allocation0 [shape = 'u32[]', space=smem, size = 0x4, offset = 0x4, fixed_abs, tag = 'smem constant byte address 0x4 - core index']
  #allocation1 [shape = 'u32[144,128]{1,0:T(1,128)}', space=vmem, size = 0x12000, scoped, tag = 'internal scratch']
  #allocation2 [shape = 'f32[8,8,128]{2,1,0:T(8,128)}', space=vmem, size = 0x8000, scoped, tag = 'scratch operand']
  #allocation3 [shape = 'f32[8,32]{1,0:T(8,128)}', space=vmem, size = 0x1000, scoped, tag = 'scratch operand']
  #allocation4 [shape = 'f32[8,32]{1,0:T(8,128)}', space=vmem, size = 0x1000, scoped, tag = 'scratch operand']
  %s0 = inlined_call_operand.vmem [shape: s32[1,1,64,1], index: 0, kind: input, shape index: {}]
  %s1 = inlined_call_operand.hbm [shape: f32[128,128], index: 1, kind: input, shape index: {}]
  %s2 = inlined_call_operand.vmem [shape: f32[32,128], index: 2, kind: input, shape index: {}]
  %s3 = inlined_call_operand.vmem [shape: f32[8,32], index: 3, kind: output, shape index: {0}]
  %s4 = inlined_call_operand.vmem [shape: f32[8,32], index: 4, kind: output, shape index: {1}]
  %5 = xla_tuple %s3, %s4
  %s6 = sld [smem:[#allocation0]]
  $region42: #{encoder_final_hidden.1} parent=0
    _
  %s8 = ssub.s32 1, %s6
  %s9 = scalar_select 0, %s8, %s6
  $region1: #{encoder_final_hidden.1} parent=0
    #allocation5 [shape = 'u8[65536]{0}', space=vmem, size = 0x10000, scoped, tag = 'input window, operand 1, single buffered']
    #allocation6 [shape = 's32[1]{0}', space=sflag, size = 0x4, scoped, tag = 'scoped memory for encoder_final_hidden.1']
    %10 = vsyncpa [#allocation6], 0
    // Predicated region
    $region2: #{encoder_final_hidden.1} parent=1 // pred_check
      _
    $region3: #{encoder_final_hidden.1} parent=1 // pred_check_branch
      %12 = sbr.rel (0) target = $region5
    $region4: #{encoder_final_hidden.1} parent=1 // pred_region
      _
    $region5: #{encoder_final_hidden.1} parent=1 // pred_fallthru
      _
    // Predicated region
    $region6: #{encoder_final_hidden.1} parent=1 // pred_check
      _
    $region7: #{encoder_final_hidden.1} parent=1 // pred_check_branch
      %14 = sbr.rel (0) target = $region9
    $region8: #{encoder_final_hidden.1} parent=1 // pred_region
      %s16 = ssub.s32 2048, 2048
      %17 = vsyncadd [#allocation6], %s16
      %s18 = sshll.u32 [#allocation5], 4
      %s19 = int_to_ptr.vmem [resolvable:$true] %s18
      %24 = dma.hbm_to_vmem [thread:$0]  %s1, 2048, %s19, [#allocation6], 128, 128, 8
    $region9: #{encoder_final_hidden.1} parent=1 // pred_fallthru
      _
    // Predicated region
    $region10: #{encoder_final_hidden.1} parent=1 // pred_check
      _
    $region11: #{encoder_final_hidden.1} parent=1 // pred_check_branch
      %26 = sbr.rel (0) target = $region13
    $region12: #{encoder_final_hidden.1} parent=1 // pred_region
      _
    $region13: #{encoder_final_hidden.1} parent=1 // pred_fallthru
      _
    // Predicated region
    $region14: #{encoder_final_hidden.1} parent=1 // pred_check
      _
    $region15: #{encoder_final_hidden.1} parent=1 // pred_check_branch
      %28 = sbr.rel (0) target = $region17
    $region16: #{encoder_final_hidden.1} parent=1 // pred_region
      %29 = dma.done [#allocation6], 2048
    $region17: #{encoder_final_hidden.1} parent=1 // pred_fallthru
      _
    %p30 = scmp.eq.s32.totalorder 0, 0
    // Predicated region
    $region18: #{encoder_final_hidden.1} parent=1 // pred_check
      %p31 = pneg %p30
    $region19: #{encoder_final_hidden.1} parent=1 // pred_check_branch
      %33 = sbr.rel (%p31) target = $region21
    $region20: #{encoder_final_hidden.1} parent=1 // pred_region
      %vm34 = vcmask 261120
      %35 = vst.msk [vmem:[#allocation3] sm:$0xff] %vm34, 0.0
      %36 = vst.msk [vmem:[#allocation4] sm:$0xff] %vm34, 0.0
    $region21: #{encoder_final_hidden.1} parent=1 // pred_fallthru
      _
    %v37 = vld [vmem:[%s0] sm:$0xff]
    %v38 = vld [vmem:[%s0 + $0x8] sm:$0xff]
    %v39 = vld [vmem:[%s0 + $0x10] sm:$0xff]
    %v40 = vld [vmem:[%s0 + $0x18] sm:$0xff]
    %v41 = vld [vmem:[%s0 + $0x20] sm:$0xff]
    %v42 = vld [vmem:[%s0 + $0x28] sm:$0xff]
    %v43 = vld [vmem:[%s0 + $0x30] sm:$0xff]
    %v44 = vld [vmem:[%s0 + $0x38] sm:$0xff]
    %v45 = vlaneseq
    %v46 = vand.u32 %v45, 127
    %47 = vset.pattern.permute.xlu0 0
    %48 = vperm.xlu0 %47, %v37
    %v49 = vpop.permute.xlu0 %48
    %50 = vset.pattern.permute.xlu0 0
    %51 = vperm.xlu0 %50, %v38
    %v52 = vpop.permute.xlu0 %51
    %53 = vset.pattern.permute.xlu0 0
    %54 = vperm.xlu0 %53, %v39
    %v55 = vpop.permute.xlu0 %54
    %56 = vset.pattern.permute.xlu0 0
    %57 = vperm.xlu0 %56, %v40
    %v58 = vpop.permute.xlu0 %57
    %59 = vset.pattern.permute.xlu0 0
    %60 = vperm.xlu0 %59, %v41
    %v61 = vpop.permute.xlu0 %60
    %62 = vset.pattern.permute.xlu0 0
    %63 = vperm.xlu0 %62, %v42
    %v64 = vpop.permute.xlu0 %63
    %65 = vset.pattern.permute.xlu0 0
    %66 = vperm.xlu0 %65, %v43
    %v67 = vpop.permute.xlu0 %66
    %68 = vset.pattern.permute.xlu0 0
    %69 = vperm.xlu0 %68, %v44
    %v70 = vpop.permute.xlu0 %69
    %vm71 = vcmp.eq.s32.totalorder %v46, %v49
    %vm72 = vcmp.eq.s32.totalorder %v46, %v52
    %vm73 = vcmp.eq.s32.totalorder %v46, %v55
    %vm74 = vcmp.eq.s32.totalorder %v46, %v58
    %vm75 = vcmp.eq.s32.totalorder %v46, %v61
    %vm76 = vcmp.eq.s32.totalorder %v46, %v64
    %vm77 = vcmp.eq.s32.totalorder %v46, %v67
    %vm78 = vcmp.eq.s32.totalorder %v46, %v70
    %v79 = vsel %vm71, 1, 0
    %v80 = vsel %vm72, 1, 0
    %v81 = vsel %vm73, 1, 0
    %v82 = vsel %vm74, 1, 0
    %v83 = vsel %vm75, 1, 0
    %v84 = vsel %vm76, 1, 0
    %v85 = vsel %vm77, 1, 0
    %v86 = vsel %vm78, 1, 0
    %v87 = vcvt.s32.f32 %v79
    %v88 = vcvt.s32.f32 %v80
    %v89 = vcvt.s32.f32 %v81
    %v90 = vcvt.s32.f32 %v82
    %v91 = vcvt.s32.f32 %v83
    %v92 = vcvt.s32.f32 %v84
    %v93 = vcvt.s32.f32 %v85
    %v94 = vcvt.s32.f32 %v86
    %v95 = vld [vmem:[#allocation5] sm:$0xff]
    %v96 = vld [vmem:[#allocation5 + $0x8] sm:$0xff]
    %v97 = vld [vmem:[#allocation5 + $0x10] sm:$0xff]
    %v98 = vld [vmem:[#allocation5 + $0x18] sm:$0xff]
    %v99 = vld [vmem:[#allocation5 + $0x20] sm:$0xff]
    %v100 = vld [vmem:[#allocation5 + $0x28] sm:$0xff]
    %v101 = vld [vmem:[#allocation5 + $0x30] sm:$0xff]
    %v102 = vld [vmem:[#allocation5 + $0x38] sm:$0xff]
    %v103 = vld [vmem:[#allocation5 + $0x40] sm:$0xff]
    %v104 = vld [vmem:[#allocation5 + $0x48] sm:$0xff]
    %v105 = vld [vmem:[#allocation5 + $0x50] sm:$0xff]
    %v106 = vld [vmem:[#allocation5 + $0x58] sm:$0xff]
    %v107 = vld [vmem:[#allocation5 + $0x60] sm:$0xff]
    %v108 = vld [vmem:[#allocation5 + $0x68] sm:$0xff]
    %v109 = vld [vmem:[#allocation5 + $0x70] sm:$0xff]
    %v110 = vld [vmem:[#allocation5 + $0x78] sm:$0xff]
    %111 = vmatprep.subr.mxu0 0.0
    %112 = vmatpush1.msra.mxu0 %v110
    %113 = vmatprep.subr.mxu0 0.0
    %114 = vmatpush1.msra.mxu0 %v109
    %115 = vmatprep.subr.mxu0 0.0
    %116 = vmatpush1.msra.mxu0 %v108
    %117 = vmatprep.subr.mxu0 0.0
    %118 = vmatpush1.msra.mxu0 %v107
    %119 = vmatprep.subr.mxu0 0.0
    %120 = vmatpush1.msra.mxu0 %v106
    %121 = vmatprep.subr.mxu0 0.0
    %122 = vmatpush1.msra.mxu0 %v105
    %123 = vmatprep.subr.mxu0 0.0
    %124 = vmatpush1.msra.mxu0 %v104
    %125 = vmatprep.subr.mxu0 0.0
    %126 = vmatpush1.msra.mxu0 %v103
    %127 = vmatprep.subr.mxu0 0.0
    %128 = vmatpush1.msra.mxu0 %v102
    %129 = vmatprep.subr.mxu0 0.0
    %130 = vmatpush1.msra.mxu0 %v101
    %131 = vmatprep.subr.mxu0 0.0
    %132 = vmatpush1.msra.mxu0 %v100
    %133 = vmatprep.subr.mxu0 0.0
    %134 = vmatpush1.msra.mxu0 %v99
    %135 = vmatprep.subr.mxu0 0.0
    %136 = vmatpush1.msra.mxu0 %v98
    %137 = vmatprep.subr.mxu0 0.0
    %138 = vmatpush1.msra.mxu0 %v97
    %139 = vmatprep.subr.mxu0 0.0
    %140 = vmatpush1.msra.mxu0 %v96
    %141 = vmatprep.subr.mxu0 0.0
    %142 = vmatpush1.msra.mxu0 %v95
    %143 = vmatprep.subr.mxu0 0.0
    %144 = vmatpush2.msra.mxu0 0.0
    %145 = vmatprep.subr.mxu0 0.0
    %146 = vmatpush2.msra.mxu0 0.0
    %147 = vmatprep.subr.mxu0 0.0
    %148 = vmatpush2.msra.mxu0 0.0
    %149 = vmatprep.subr.mxu0 0.0
    %150 = vmatpush2.msra.mxu0 0.0
    %151 = vmatprep.subr.mxu0 0.0
    %152 = vmatpush2.msra.mxu0 0.0
    %153 = vmatprep.subr.mxu0 0.0
    %154 = vmatpush2.msra.mxu0 0.0
    %155 = vmatprep.subr.mxu0 0.0
    %156 = vmatpush2.msra.mxu0 0.0
    %157 = vmatprep.subr.mxu0 0.0
    %158 = vmatpush2.msra.mxu0 0.0
    %159 = vmatprep.subr.mxu0 0.0
    %160 = vmatpush2.msra.mxu0 0.0
    %161 = vmatprep.subr.mxu0 0.0
    %162 = vmatpush2.msra.mxu0 0.0
    %163 = vmatprep.subr.mxu0 0.0
    %164 = vmatpush2.msra.mxu0 0.0
    %165 = vmatprep.subr.mxu0 0.0
    %166 = vmatpush2.msra.mxu0 0.0
    %167 = vmatprep.subr.mxu0 0.0
    %168 = vmatpush2.msra.mxu0 0.0
    %169 = vmatprep.subr.mxu0 0.0
    %170 = vmatpush2.msra.mxu0 0.0
    %171 = vmatprep.subr.mxu0 0.0
    %172 = vmatpush2.msra.mxu0 0.0
    %173 = vmatprep.subr.mxu0 0.0
    %174 = vmatpush2.msra.mxu0 0.0
    %175 = vmatprep.mubr.f32.mxu0 0.0
    %176 = vmatmul.mubr.f32.gmra.mxu0 %v87
    %v177 = vpop.f32.mrf.mxu0
    %v178 = vadd.f32 0.0, %v177
    %v179 = vpop.f32.mrf.mxu0
    %180 = vmatprep.mubr.f32.mxu0 0.0
    %181 = vmatmul.mubr.f32.gmra.mxu0 %v88
    %v182 = vpop.f32.mrf.mxu0
    %v183 = vadd.f32 0.0, %v182
    %v184 = vpop.f32.mrf.mxu0
    %185 = vmatprep.mubr.f32.mxu0 0.0
    %186 = vmatmul.mubr.f32.gmra.mxu0 %v89
    %v187 = vpop.f32.mrf.mxu0
    %v188 = vadd.f32 0.0, %v187
    %v189 = vpop.f32.mrf.mxu0
    %190 = vmatprep.mubr.f32.mxu0 0.0
    %191 = vmatmul.mubr.f32.gmra.mxu0 %v90
    %v192 = vpop.f32.mrf.mxu0
    %v193 = vadd.f32 0.0, %v192
    %v194 = vpop.f32.mrf.mxu0
    %195 = vmatprep.mubr.f32.mxu0 0.0
    %196 = vmatmul.mubr.f32.gmra.mxu0 %v91
    %v197 = vpop.f32.mrf.mxu0
    %v198 = vadd.f32 0.0, %v197
    %v199 = vpop.f32.mrf.mxu0
    %200 = vmatprep.mubr.f32.mxu0 0.0
    %201 = vmatmul.mubr.f32.gmra.mxu0 %v92
    %v202 = vpop.f32.mrf.mxu0
    %v203 = vadd.f32 0.0, %v202
    %v204 = vpop.f32.mrf.mxu0
    %205 = vmatprep.mubr.f32.mxu0 0.0
    %206 = vmatmul.mubr.f32.gmra.mxu0 %v93
    %v207 = vpop.f32.mrf.mxu0
    %v208 = vadd.f32 0.0, %v207
    %v209 = vpop.f32.mrf.mxu0
    %210 = vmatprep.mubr.f32.mxu0 0.0
    %211 = vmatmul.mubr.f32.gmra.mxu0 %v94
    %v212 = vpop.f32.mrf.mxu0
    %v213 = vadd.f32 0.0, %v212
    %v214 = vpop.f32.mrf.mxu0
    %215 = vdwg.mxu0
    %216 = vst [vmem:[#allocation2] sm:$0xff] %v178
    %217 = vst [vmem:[#allocation2 + $0x8] sm:$0xff] %v183
    %218 = vst [vmem:[#allocation2 + $0x10] sm:$0xff] %v188
    %219 = vst [vmem:[#allocation2 + $0x18] sm:$0xff] %v193
    %220 = vst [vmem:[#allocation2 + $0x20] sm:$0xff] %v198
    %221 = vst [vmem:[#allocation2 + $0x28] sm:$0xff] %v203
    %222 = vst [vmem:[#allocation2 + $0x30] sm:$0xff] %v208
    %223 = vst [vmem:[#allocation2 + $0x38] sm:$0xff] %v213
    %v224 = vld [vmem:[%s2] sm:$0xff]
    %v225 = vld [vmem:[%s2 + $0x8] sm:$0xff]
    %v226 = vld [vmem:[%s2 + $0x10] sm:$0xff]
    %v227 = vld [vmem:[%s2 + $0x18] sm:$0xff]
    %vm228 = vcmp.ge.s32.totalorder %v46, 64
    %vm229 = vcmp.lt.s32.totalorder %v46, 96
    %vm230 = vmand %vm228, %vm229
    %v231 = vld [vmem:[#allocation3] sm:$0xff]
    %v232 = vld [vmem:[#allocation4] sm:$0xff]
    %v233 = vld [vmem:[#allocation2] sm:$0xff]
    %vm234 = vcmask 261120
    %v236 = vsel %vm234, %v231, 0
    %238 = vmatprep.subr.mxu0 0.0
    %239 = vmatpush1.msra.mxu0 0.0
    %240 = vmatprep.subr.mxu0 0.0
    %241 = vmatpush1.msra.mxu0 0.0
    %242 = vmatprep.subr.mxu0 0.0
    %243 = vmatpush1.msra.mxu0 0.0
    %244 = vmatprep.subr.mxu0 0.0
    %245 = vmatpush1.msra.mxu0 0.0
    %246 = vmatprep.subr.mxu0 0.0
    %247 = vmatpush1.msra.mxu0 0.0
    %248 = vmatprep.subr.mxu0 0.0
    %249 = vmatpush1.msra.mxu0 0.0
    %250 = vmatprep.subr.mxu0 0.0
    %251 = vmatpush1.msra.mxu0 0.0
    %252 = vmatprep.subr.mxu0 0.0
    %253 = vmatpush1.msra.mxu0 0.0
    %254 = vmatprep.subr.mxu0 0.0
    %255 = vmatpush1.msra.mxu0 0.0
    %256 = vmatprep.subr.mxu0 0.0
    %257 = vmatpush1.msra.mxu0 0.0
    %258 = vmatprep.subr.mxu0 0.0
    %259 = vmatpush1.msra.mxu0 0.0
    %260 = vmatprep.subr.mxu0 0.0
    %261 = vmatpush1.msra.mxu0 0.0
    %262 = vmatprep.subr.mxu0 0.0
    %263 = vmatpush1.msra.mxu0 %v227
    %264 = vmatprep.subr.mxu0 0.0
    %265 = vmatpush1.msra.mxu0 %v226
    %266 = vmatprep.subr.mxu0 0.0
    %267 = vmatpush1.msra.mxu0 %v225
    %268 = vmatprep.subr.mxu0 0.0
    %269 = vmatpush1.msra.mxu0 %v224
    %270 = vmatprep.subr.mxu0 0.0
    %271 = vmatpush2.msra.mxu0 0.0
    %272 = vmatprep.subr.mxu0 0.0
    %273 = vmatpush2.msra.mxu0 0.0
    %274 = vmatprep.subr.mxu0 0.0
    %275 = vmatpush2.msra.mxu0 0.0
    %276 = vmatprep.subr.mxu0 0.0
    %277 = vmatpush2.msra.mxu0 0.0
    %278 = vmatprep.subr.mxu0 0.0
    %279 = vmatpush2.msra.mxu0 0.0
    %280 = vmatprep.subr.mxu0 0.0
    %281 = vmatpush2.msra.mxu0 0.0
    %282 = vmatprep.subr.mxu0 0.0
    %283 = vmatpush2.msra.mxu0 0.0
    %284 = vmatprep.subr.mxu0 0.0
    %285 = vmatpush2.msra.mxu0 0.0
    %286 = vmatprep.subr.mxu0 0.0
    %287 = vmatpush2.msra.mxu0 0.0
    %288 = vmatprep.subr.mxu0 0.0
    %289 = vmatpush2.msra.mxu0 0.0
    %290 = vmatprep.subr.mxu0 0.0
    %291 = vmatpush2.msra.mxu0 0.0
    %292 = vmatprep.subr.mxu0 0.0
    %293 = vmatpush2.msra.mxu0 0.0
    %294 = vmatprep.subr.mxu0 0.0
    %295 = vmatpush2.msra.mxu0 0.0
    %296 = vmatprep.subr.mxu0 0.0
    %297 = vmatpush2.msra.mxu0 0.0
    %298 = vmatprep.subr.mxu0 0.0
    %299 = vmatpush2.msra.mxu0 0.0
    %300 = vmatprep.subr.mxu0 0.0
    %301 = vmatpush2.msra.mxu0 0.0
    %302 = vmatprep.mubr.f32.mxu0 0.0
    %303 = vmatmul.mubr.f32.gmra.mxu0 %v236
    %v304 = vpop.f32.mrf.mxu0
    %v305 = vadd.f32 0.0, %v304
    %v306 = vpop.f32.mrf.mxu0
    %307 = vdwg.mxu0
    %v308 = vadd.f32 %v233, %v305
    %v309 = vtanh.pop %v308
    %v310 = vmul.f32 %v309, 0.5
    %v311 = vadd.f32 %v310, 0.5
    %v312 = vsel %vm230, %v309, %v311
    %314 = vrot.lane.b32.xlu0 %v232, 32
    %v315 = vpop.permute.xlu0 %314
    %v317 = vmul.f32 %v312, %v315
    %319 = vrot.lane.b32.xlu0 %v312, 64
    %v320 = vpop.permute.xlu0 %319
    %v322 = vmul.f32 %v312, %v320
    %324 = vrot.lane.b32.xlu0 %v322, 32
    %v325 = vpop.permute.xlu0 %324
    %v327 = vadd.f32 %v317, %v325
    %v328 = vtanh.pop %v327
    %330 = vrot.lane.b32.xlu0 %v328, 64
    %v331 = vpop.permute.xlu0 %330
    %v333 = vmul.f32 %v312, %v331
    %s334 = scalar_lea.vmem [#allocation2], 8
    %v335 = vld [vmem:[%s334] sm:$0xff]
    %337 = vrot.lane.b32.xlu0 %v333, 32
    %v338 = vpop.permute.xlu0 %337
    %v339 = vsel %vm234, %v338, 0
    %341 = vmatprep.subr.mxu0 0.0
    %342 = vmatpush1.msra.mxu0 0.0
    %343 = vmatprep.subr.mxu0 0.0
    %344 = vmatpush1.msra.mxu0 0.0
    %345 = vmatprep.subr.mxu0 0.0
    %346 = vmatpush1.msra.mxu0 0.0
    %347 = vmatprep.subr.mxu0 0.0
    %348 = vmatpush1.msra.mxu0 0.0
    %349 = vmatprep.subr.mxu0 0.0
    %350 = vmatpush1.msra.mxu0 0.0
    %351 = vmatprep.subr.mxu0 0.0
    %352 = vmatpush1.msra.mxu0 0.0
    %353 = vmatprep.subr.mxu0 0.0
    %354 = vmatpush1.msra.mxu0 0.0
    %355 = vmatprep.subr.mxu0 0.0
    %356 = vmatpush1.msra.mxu0 0.0
    %357 = vmatprep.subr.mxu0 0.0
    %358 = vmatpush1.msra.mxu0 0.0
    %359 = vmatprep.subr.mxu0 0.0
    %360 = vmatpush1.msra.mxu0 0.0
    %361 = vmatprep.subr.mxu0 0.0
    %362 = vmatpush1.msra.mxu0 0.0
    %363 = vmatprep.subr.mxu0 0.0
    %364 = vmatpush1.msra.mxu0 0.0
    %365 = vmatprep.subr.mxu0 0.0
    %366 = vmatpush1.msra.mxu0 %v227
    %367 = vmatprep.subr.mxu0 0.0
    %368 = vmatpush1.msra.mxu0 %v226
    %369 = vmatprep.subr.mxu0 0.0
    %370 = vmatpush1.msra.mxu0 %v225
    %371 = vmatprep.subr.mxu0 0.0
    %372 = vmatpush1.msra.mxu0 %v224
    %373 = vmatprep.subr.mxu0 0.0
    %374 = vmatpush2.msra.mxu0 0.0
    %375 = vmatprep.subr.mxu0 0.0
    %376 = vmatpush2.msra.mxu0 0.0
    %377 = vmatprep.subr.mxu0 0.0
    %378 = vmatpush2.msra.mxu0 0.0
    %379 = vmatprep.subr.mxu0 0.0
    %380 = vmatpush2.msra.mxu0 0.0
    %381 = vmatprep.subr.mxu0 0.0
    %382 = vmatpush2.msra.mxu0 0.0
    %383 = vmatprep.subr.mxu0 0.0
    %384 = vmatpush2.msra.mxu0 0.0
    %385 = vmatprep.subr.mxu0 0.0
    %386 = vmatpush2.msra.mxu0 0.0
    %387 = vmatprep.subr.mxu0 0.0
    %388 = vmatpush2.msra.mxu0 0.0
    %389 = vmatprep.subr.mxu0 0.0
    %390 = vmatpush2.msra.mxu0 0.0
    %391 = vmatprep.subr.mxu0 0.0
    %392 = vmatpush2.msra.mxu0 0.0
    %393 = vmatprep.subr.mxu0 0.0
    %394 = vmatpush2.msra.mxu0 0.0
    %395 = vmatprep.subr.mxu0 0.0
    %396 = vmatpush2.msra.mxu0 0.0
    %397 = vmatprep.subr.mxu0 0.0
    %398 = vmatpush2.msra.mxu0 0.0
    %399 = vmatprep.subr.mxu0 0.0
    %400 = vmatpush2.msra.mxu0 0.0
    %401 = vmatprep.subr.mxu0 0.0
    %402 = vmatpush2.msra.mxu0 0.0
    %403 = vmatprep.subr.mxu0 0.0
    %404 = vmatpush2.msra.mxu0 0.0
    %405 = vmatprep.mubr.f32.mxu0 0.0
    %406 = vmatmul.mubr.f32.gmra.mxu0 %v339
    %v407 = vpop.f32.mrf.mxu0
    %v408 = vadd.f32 0.0, %v407
    %v409 = vpop.f32.mrf.mxu0
    %410 = vdwg.mxu0
    %v411 = vadd.f32 %v335, %v408
    %v412 = vtanh.pop %v411
    %v413 = vmul.f32 %v412, 0.5
    %v414 = vadd.f32 %v413, 0.5
    %v415 = vsel %vm230, %v412, %v414
    %v416 = vmul.f32 %v415, %v327
    %418 = vrot.lane.b32.xlu0 %v415, 64
    %v419 = vpop.permute.xlu0 %418
    %v421 = vmul.f32 %v415, %v419
    %423 = vrot.lane.b32.xlu0 %v421, 32
    %v424 = vpop.permute.xlu0 %423
    %v426 = vadd.f32 %v416, %v424
    %v427 = vtanh.pop %v426
    %429 = vrot.lane.b32.xlu0 %v427, 64
    %v430 = vpop.permute.xlu0 %429
    %v432 = vmul.f32 %v415, %v430
    %s433 = scalar_lea.vmem [#allocation2], 16
    %v434 = vld [vmem:[%s433] sm:$0xff]
    %436 = vrot.lane.b32.xlu0 %v432, 32
    %v437 = vpop.permute.xlu0 %436
    %v438 = vsel %vm234, %v437, 0
    %440 = vmatprep.subr.mxu0 0.0
    %441 = vmatpush1.msra.mxu0 0.0
    %442 = vmatprep.subr.mxu0 0.0
    %443 = vmatpush1.msra.mxu0 0.0
    %444 = vmatprep.subr.mxu0 0.0
    %445 = vmatpush1.msra.mxu0 0.0
    %446 = vmatprep.subr.mxu0 0.0
    %447 = vmatpush1.msra.mxu0 0.0
    %448 = vmatprep.subr.mxu0 0.0
    %449 = vmatpush1.msra.mxu0 0.0
    %450 = vmatprep.subr.mxu0 0.0
    %451 = vmatpush1.msra.mxu0 0.0
    %452 = vmatprep.subr.mxu0 0.0
    %453 = vmatpush1.msra.mxu0 0.0
    %454 = vmatprep.subr.mxu0 0.0
    %455 = vmatpush1.msra.mxu0 0.0
    %456 = vmatprep.subr.mxu0 0.0
    %457 = vmatpush1.msra.mxu0 0.0
    %458 = vmatprep.subr.mxu0 0.0
    %459 = vmatpush1.msra.mxu0 0.0
    %460 = vmatprep.subr.mxu0 0.0
    %461 = vmatpush1.msra.mxu0 0.0
    %462 = vmatprep.subr.mxu0 0.0
    %463 = vmatpush1.msra.mxu0 0.0
    %464 = vmatprep.subr.mxu0 0.0
    %465 = vmatpush1.msra.mxu0 %v227
    %466 = vmatprep.subr.mxu0 0.0
    %467 = vmatpush1.msra.mxu0 %v226
    %468 = vmatprep.subr.mxu0 0.0
    %469 = vmatpush1.msra.mxu0 %v225
    %470 = vmatprep.subr.mxu0 0.0
    %471 = vmatpush1.msra.mxu0 %v224
    %472 = vmatprep.subr.mxu0 0.0
    %473 = vmatpush2.msra.mxu0 0.0
    %474 = vmatprep.subr.mxu0 0.0
    %475 = vmatpush2.msra.mxu0 0.0
    %476 = vmatprep.subr.mxu0 0.0
    %477 = vmatpush2.msra.mxu0 0.0
    %478 = vmatprep.subr.mxu0 0.0
    %479 = vmatpush2.msra.mxu0 0.0
    %480 = vmatprep.subr.mxu0 0.0
    %481 = vmatpush2.msra.mxu0 0.0
    %482 = vmatprep.subr.mxu0 0.0
    %483 = vmatpush2.msra.mxu0 0.0
    %484 = vmatprep.subr.mxu0 0.0
    %485 = vmatpush2.msra.mxu0 0.0
    %486 = vmatprep.subr.mxu0 0.0
    %487 = vmatpush2.msra.mxu0 0.0
    %488 = vmatprep.subr.mxu0 0.0
    %489 = vmatpush2.msra.mxu0 0.0
    %490 = vmatprep.subr.mxu0 0.0
    %491 = vmatpush2.msra.mxu0 0.0
    %492 = vmatprep.subr.mxu0 0.0
    %493 = vmatpush2.msra.mxu0 0.0
    %494 = vmatprep.subr.mxu0 0.0
    %495 = vmatpush2.msra.mxu0 0.0
    %496 = vmatprep.subr.mxu0 0.0
    %497 = vmatpush2.msra.mxu0 0.0
    %498 = vmatprep.subr.mxu0 0.0
    %499 = vmatpush2.msra.mxu0 0.0
    %500 = vmatprep.subr.mxu0 0.0
    %501 = vmatpush2.msra.mxu0 0.0
    %502 = vmatprep.subr.mxu0 0.0
    %503 = vmatpush2.msra.mxu0 0.0
    %504 = vmatprep.mubr.f32.mxu0 0.0
    %505 = vmatmul.mubr.f32.gmra.mxu0 %v438
    %v506 = vpop.f32.mrf.mxu0
    %v507 = vadd.f32 0.0, %v506
    %v508 = vpop.f32.mrf.mxu0
    %509 = vdwg.mxu0
    %v510 = vadd.f32 %v434, %v507
    %v511 = vtanh.pop %v510
    %v512 = vmul.f32 %v511, 0.5
    %v513 = vadd.f32 %v512, 0.5
    %v514 = vsel %vm230, %v511, %v513
    %v515 = vmul.f32 %v514, %v426
    %517 = vrot.lane.b32.xlu0 %v514, 64
    %v518 = vpop.permute.xlu0 %517
    %v520 = vmul.f32 %v514, %v518
    %522 = vrot.lane.b32.xlu0 %v520, 32
    %v523 = vpop.permute.xlu0 %522
    %v525 = vadd.f32 %v515, %v523
    %v526 = vtanh.pop %v525
    %528 = vrot.lane.b32.xlu0 %v526, 64
    %v529 = vpop.permute.xlu0 %528
    %v531 = vmul.f32 %v514, %v529
    %s532 = scalar_lea.vmem [#allocation2], 24
    %v533 = vld [vmem:[%s532] sm:$0xff]
    %535 = vrot.lane.b32.xlu0 %v531, 32
    %v536 = vpop.permute.xlu0 %535
    %v537 = vsel %vm234, %v536, 0
    %539 = vmatprep.subr.mxu0 0.0
    %540 = vmatpush1.msra.mxu0 0.0
    %541 = vmatprep.subr.mxu0 0.0
    %542 = vmatpush1.msra.mxu0 0.0
    %543 = vmatprep.subr.mxu0 0.0
    %544 = vmatpush1.msra.mxu0 0.0
    %545 = vmatprep.subr.mxu0 0.0
    %546 = vmatpush1.msra.mxu0 0.0
    %547 = vmatprep.subr.mxu0 0.0
    %548 = vmatpush1.msra.mxu0 0.0
    %549 = vmatprep.subr.mxu0 0.0
    %550 = vmatpush1.msra.mxu0 0.0
    %551 = vmatprep.subr.mxu0 0.0
    %552 = vmatpush1.msra.mxu0 0.0
    %553 = vmatprep.subr.mxu0 0.0
    %554 = vmatpush1.msra.mxu0 0.0
    %555 = vmatprep.subr.mxu0 0.0
    %556 = vmatpush1.msra.mxu0 0.0
    %557 = vmatprep.subr.mxu0 0.0
    %558 = vmatpush1.msra.mxu0 0.0
    %559 = vmatprep.subr.mxu0 0.0
    %560 = vmatpush1.msra.mxu0 0.0
    %561 = vmatprep.subr.mxu0 0.0
    %562 = vmatpush1.msra.mxu0 0.0
    %563 = vmatprep.subr.mxu0 0.0
    %564 = vmatpush1.msra.mxu0 %v227
    %565 = vmatprep.subr.mxu0 0.0
    %566 = vmatpush1.msra.mxu0 %v226
    %567 = vmatprep.subr.mxu0 0.0
    %568 = vmatpush1.msra.mxu0 %v225
    %569 = vmatprep.subr.mxu0 0.0
    %570 = vmatpush1.msra.mxu0 %v224
    %571 = vmatprep.subr.mxu0 0.0
    %572 = vmatpush2.msra.mxu0 0.0
    %573 = vmatprep.subr.mxu0 0.0
    %574 = vmatpush2.msra.mxu0 0.0
    %575 = vmatprep.subr.mxu0 0.0
    %576 = vmatpush2.msra.mxu0 0.0
    %577 = vmatprep.subr.mxu0 0.0
    %578 = vmatpush2.msra.mxu0 0.0
    %579 = vmatprep.subr.mxu0 0.0
    %580 = vmatpush2.msra.mxu0 0.0
    %581 = vmatprep.subr.mxu0 0.0
    %582 = vmatpush2.msra.mxu0 0.0
    %583 = vmatprep.subr.mxu0 0.0
    %584 = vmatpush2.msra.mxu0 0.0
    %585 = vmatprep.subr.mxu0 0.0
    %586 = vmatpush2.msra.mxu0 0.0
    %587 = vmatprep.subr.mxu0 0.0
    %588 = vmatpush2.msra.mxu0 0.0
    %589 = vmatprep.subr.mxu0 0.0
    %590 = vmatpush2.msra.mxu0 0.0
    %591 = vmatprep.subr.mxu0 0.0
    %592 = vmatpush2.msra.mxu0 0.0
    %593 = vmatprep.subr.mxu0 0.0
    %594 = vmatpush2.msra.mxu0 0.0
    %595 = vmatprep.subr.mxu0 0.0
    %596 = vmatpush2.msra.mxu0 0.0
    %597 = vmatprep.subr.mxu0 0.0
    %598 = vmatpush2.msra.mxu0 0.0
    %599 = vmatprep.subr.mxu0 0.0
    %600 = vmatpush2.msra.mxu0 0.0
    %601 = vmatprep.subr.mxu0 0.0
    %602 = vmatpush2.msra.mxu0 0.0
    %603 = vmatprep.mubr.f32.mxu0 0.0
    %604 = vmatmul.mubr.f32.gmra.mxu0 %v537
    %v605 = vpop.f32.mrf.mxu0
    %v606 = vadd.f32 0.0, %v605
    %v607 = vpop.f32.mrf.mxu0
    %608 = vdwg.mxu0
    %v609 = vadd.f32 %v533, %v606
    %v610 = vtanh.pop %v609
    %v611 = vmul.f32 %v610, 0.5
    %v612 = vadd.f32 %v611, 0.5
    %v613 = vsel %vm230, %v610, %v612
    %v614 = vmul.f32 %v613, %v525
    %616 = vrot.lane.b32.xlu0 %v613, 64
    %v617 = vpop.permute.xlu0 %616
    %v619 = vmul.f32 %v613, %v617
    %621 = vrot.lane.b32.xlu0 %v619, 32
    %v622 = vpop.permute.xlu0 %621
    %v624 = vadd.f32 %v614, %v622
    %v625 = vtanh.pop %v624
    %627 = vrot.lane.b32.xlu0 %v625, 64
    %v628 = vpop.permute.xlu0 %627
    %v630 = vmul.f32 %v613, %v628
    %s631 = scalar_lea.vmem [#allocation2], 32
    %v632 = vld [vmem:[%s631] sm:$0xff]
    %634 = vrot.lane.b32.xlu0 %v630, 32
    %v635 = vpop.permute.xlu0 %634
    %v636 = vsel %vm234, %v635, 0
    %638 = vmatprep.subr.mxu0 0.0
    %639 = vmatpush1.msra.mxu0 0.0
    %640 = vmatprep.subr.mxu0 0.0
    %641 = vmatpush1.msra.mxu0 0.0
    %642 = vmatprep.subr.mxu0 0.0
    %643 = vmatpush1.msra.mxu0 0.0
    %644 = vmatprep.subr.mxu0 0.0
    %645 = vmatpush1.msra.mxu0 0.0
    %646 = vmatprep.subr.mxu0 0.0
    %647 = vmatpush1.msra.mxu0 0.0
    %648 = vmatprep.subr.mxu0 0.0
    %649 = vmatpush1.msra.mxu0 0.0
    %650 = vmatprep.subr.mxu0 0.0
    %651 = vmatpush1.msra.mxu0 0.0
    %652 = vmatprep.subr.mxu0 0.0
    %653 = vmatpush1.msra.mxu0 0.0
    %654 = vmatprep.subr.mxu0 0.0
    %655 = vmatpush1.msra.mxu0 0.0
    %656 = vmatprep.subr.mxu0 0.0
    %657 = vmatpush1.msra.mxu0 0.0
    %658 = vmatprep.subr.mxu0 0.0
    %659 = vmatpush1.msra.mxu0 0.0
    %660 = vmatprep.subr.mxu0 0.0
    %661 = vmatpush1.msra.mxu0 0.0
    %662 = vmatprep.subr.mxu0 0.0
    %663 = vmatpush1.msra.mxu0 %v227
    %664 = vmatprep.subr.mxu0 0.0
    %665 = vmatpush1.msra.mxu0 %v226
    %666 = vmatprep.subr.mxu0 0.0
    %667 = vmatpush1.msra.mxu0 %v225
    %668 = vmatprep.subr.mxu0 0.0
    %669 = vmatpush1.msra.mxu0 %v224
    %670 = vmatprep.subr.mxu0 0.0
    %671 = vmatpush2.msra.mxu0 0.0
    %672 = vmatprep.subr.mxu0 0.0
    %673 = vmatpush2.msra.mxu0 0.0
    %674 = vmatprep.subr.mxu0 0.0
    %675 = vmatpush2.msra.mxu0 0.0
    %676 = vmatprep.subr.mxu0 0.0
    %677 = vmatpush2.msra.mxu0 0.0
    %678 = vmatprep.subr.mxu0 0.0
    %679 = vmatpush2.msra.mxu0 0.0
    %680 = vmatprep.subr.mxu0 0.0
    %681 = vmatpush2.msra.mxu0 0.0
    %682 = vmatprep.subr.mxu0 0.0
    %683 = vmatpush2.msra.mxu0 0.0
    %684 = vmatprep.subr.mxu0 0.0
    %685 = vmatpush2.msra.mxu0 0.0
    %686 = vmatprep.subr.mxu0 0.0
    %687 = vmatpush2.msra.mxu0 0.0
    %688 = vmatprep.subr.mxu0 0.0
    %689 = vmatpush2.msra.mxu0 0.0
    %690 = vmatprep.subr.mxu0 0.0
    %691 = vmatpush2.msra.mxu0 0.0
    %692 = vmatprep.subr.mxu0 0.0
    %693 = vmatpush2.msra.mxu0 0.0
    %694 = vmatprep.subr.mxu0 0.0
    %695 = vmatpush2.msra.mxu0 0.0
    %696 = vmatprep.subr.mxu0 0.0
    %697 = vmatpush2.msra.mxu0 0.0
    %698 = vmatprep.subr.mxu0 0.0
    %699 = vmatpush2.msra.mxu0 0.0
    %700 = vmatprep.subr.mxu0 0.0
    %701 = vmatpush2.msra.mxu0 0.0
    %702 = vmatprep.mubr.f32.mxu0 0.0
    %703 = vmatmul.mubr.f32.gmra.mxu0 %v636
    %v704 = vpop.f32.mrf.mxu0
    %v705 = vadd.f32 0.0, %v704
    %v706 = vpop.f32.mrf.mxu0
    %707 = vdwg.mxu0
    %v708 = vadd.f32 %v632, %v705
    %v709 = vtanh.pop %v708
    %v710 = vmul.f32 %v709, 0.5
    %v711 = vadd.f32 %v710, 0.5
    %v712 = vsel %vm230, %v709, %v711
    %v713 = vmul.f32 %v712, %v624
    %715 = vrot.lane.b32.xlu0 %v712, 64
    %v716 = vpop.permute.xlu0 %715
    %v718 = vmul.f32 %v712, %v716
    %720 = vrot.lane.b32.xlu0 %v718, 32
    %v721 = vpop.permute.xlu0 %720
    %v723 = vadd.f32 %v713, %v721
    %v724 = vtanh.pop %v723
    %726 = vrot.lane.b32.xlu0 %v724, 64
    %v727 = vpop.permute.xlu0 %726
    %v729 = vmul.f32 %v712, %v727
    %s730 = scalar_lea.vmem [#allocation2], 40
    %v731 = vld [vmem:[%s730] sm:$0xff]
    %733 = vrot.lane.b32.xlu0 %v729, 32
    %v734 = vpop.permute.xlu0 %733
    %v735 = vsel %vm234, %v734, 0
    %737 = vmatprep.subr.mxu0 0.0
    %738 = vmatpush1.msra.mxu0 0.0
    %739 = vmatprep.subr.mxu0 0.0
    %740 = vmatpush1.msra.mxu0 0.0
    %741 = vmatprep.subr.mxu0 0.0
    %742 = vmatpush1.msra.mxu0 0.0
    %743 = vmatprep.subr.mxu0 0.0
    %744 = vmatpush1.msra.mxu0 0.0
    %745 = vmatprep.subr.mxu0 0.0
    %746 = vmatpush1.msra.mxu0 0.0
    %747 = vmatprep.subr.mxu0 0.0
    %748 = vmatpush1.msra.mxu0 0.0
    %749 = vmatprep.subr.mxu0 0.0
    %750 = vmatpush1.msra.mxu0 0.0
    %751 = vmatprep.subr.mxu0 0.0
    %752 = vmatpush1.msra.mxu0 0.0
    %753 = vmatprep.subr.mxu0 0.0
    %754 = vmatpush1.msra.mxu0 0.0
    %755 = vmatprep.subr.mxu0 0.0
    %756 = vmatpush1.msra.mxu0 0.0
    %757 = vmatprep.subr.mxu0 0.0
    %758 = vmatpush1.msra.mxu0 0.0
    %759 = vmatprep.subr.mxu0 0.0
    %760 = vmatpush1.msra.mxu0 0.0
    %761 = vmatprep.subr.mxu0 0.0
    %762 = vmatpush1.msra.mxu0 %v227
    %763 = vmatprep.subr.mxu0 0.0
    %764 = vmatpush1.msra.mxu0 %v226
    %765 = vmatprep.subr.mxu0 0.0
    %766 = vmatpush1.msra.mxu0 %v225
    %767 = vmatprep.subr.mxu0 0.0
    %768 = vmatpush1.msra.mxu0 %v224
    %769 = vmatprep.subr.mxu0 0.0
    %770 = vmatpush2.msra.mxu0 0.0
    %771 = vmatprep.subr.mxu0 0.0
    %772 = vmatpush2.msra.mxu0 0.0
    %773 = vmatprep.subr.mxu0 0.0
    %774 = vmatpush2.msra.mxu0 0.0
    %775 = vmatprep.subr.mxu0 0.0
    %776 = vmatpush2.msra.mxu0 0.0
    %777 = vmatprep.subr.mxu0 0.0
    %778 = vmatpush2.msra.mxu0 0.0
    %779 = vmatprep.subr.mxu0 0.0
    %780 = vmatpush2.msra.mxu0 0.0
    %781 = vmatprep.subr.mxu0 0.0
    %782 = vmatpush2.msra.mxu0 0.0
    %783 = vmatprep.subr.mxu0 0.0
    %784 = vmatpush2.msra.mxu0 0.0
    %785 = vmatprep.subr.mxu0 0.0
    %786 = vmatpush2.msra.mxu0 0.0
    %787 = vmatprep.subr.mxu0 0.0
    %788 = vmatpush2.msra.mxu0 0.0
    %789 = vmatprep.subr.mxu0 0.0
    %790 = vmatpush2.msra.mxu0 0.0
    %791 = vmatprep.subr.mxu0 0.0
    %792 = vmatpush2.msra.mxu0 0.0
    %793 = vmatprep.subr.mxu0 0.0
    %794 = vmatpush2.msra.mxu0 0.0
    %795 = vmatprep.subr.mxu0 0.0
    %796 = vmatpush2.msra.mxu0 0.0
    %797 = vmatprep.subr.mxu0 0.0
    %798 = vmatpush2.msra.mxu0 0.0
    %799 = vmatprep.subr.mxu0 0.0
    %800 = vmatpush2.msra.mxu0 0.0
    %801 = vmatprep.mubr.f32.mxu0 0.0
    %802 = vmatmul.mubr.f32.gmra.mxu0 %v735
    %v803 = vpop.f32.mrf.mxu0
    %v804 = vadd.f32 0.0, %v803
    %v805 = vpop.f32.mrf.mxu0
    %806 = vdwg.mxu0
    %v807 = vadd.f32 %v731, %v804
    %v808 = vtanh.pop %v807
    %v809 = vmul.f32 %v808, 0.5
    %v810 = vadd.f32 %v809, 0.5
    %v811 = vsel %vm230, %v808, %v810
    %v812 = vmul.f32 %v811, %v723
    %814 = vrot.lane.b32.xlu0 %v811, 64
    %v815 = vpop.permute.xlu0 %814
    %v817 = vmul.f32 %v811, %v815
    %819 = vrot.lane.b32.xlu0 %v817, 32
    %v820 = vpop.permute.xlu0 %819
    %v822 = vadd.f32 %v812, %v820
    %v823 = vtanh.pop %v822
    %825 = vrot.lane.b32.xlu0 %v823, 64
    %v826 = vpop.permute.xlu0 %825
    %v828 = vmul.f32 %v811, %v826
    %s829 = scalar_lea.vmem [#allocation2], 48
    %v830 = vld [vmem:[%s829] sm:$0xff]
    %832 = vrot.lane.b32.xlu0 %v828, 32
    %v833 = vpop.permute.xlu0 %832
    %v834 = vsel %vm234, %v833, 0
    %836 = vmatprep.subr.mxu0 0.0
    %837 = vmatpush1.msra.mxu0 0.0
    %838 = vmatprep.subr.mxu0 0.0
    %839 = vmatpush1.msra.mxu0 0.0
    %840 = vmatprep.subr.mxu0 0.0
    %841 = vmatpush1.msra.mxu0 0.0
    %842 = vmatprep.subr.mxu0 0.0
    %843 = vmatpush1.msra.mxu0 0.0
    %844 = vmatprep.subr.mxu0 0.0
    %845 = vmatpush1.msra.mxu0 0.0
    %846 = vmatprep.subr.mxu0 0.0
    %847 = vmatpush1.msra.mxu0 0.0
    %848 = vmatprep.subr.mxu0 0.0
    %849 = vmatpush1.msra.mxu0 0.0
    %850 = vmatprep.subr.mxu0 0.0
    %851 = vmatpush1.msra.mxu0 0.0
    %852 = vmatprep.subr.mxu0 0.0
    %853 = vmatpush1.msra.mxu0 0.0
    %854 = vmatprep.subr.mxu0 0.0
    %855 = vmatpush1.msra.mxu0 0.0
    %856 = vmatprep.subr.mxu0 0.0
    %857 = vmatpush1.msra.mxu0 0.0
    %858 = vmatprep.subr.mxu0 0.0
    %859 = vmatpush1.msra.mxu0 0.0
    %860 = vmatprep.subr.mxu0 0.0
    %861 = vmatpush1.msra.mxu0 %v227
    %862 = vmatprep.subr.mxu0 0.0
    %863 = vmatpush1.msra.mxu0 %v226
    %864 = vmatprep.subr.mxu0 0.0
    %865 = vmatpush1.msra.mxu0 %v225
    %866 = vmatprep.subr.mxu0 0.0
    %867 = vmatpush1.msra.mxu0 %v224
    %868 = vmatprep.subr.mxu0 0.0
    %869 = vmatpush2.msra.mxu0 0.0
    %870 = vmatprep.subr.mxu0 0.0
    %871 = vmatpush2.msra.mxu0 0.0
    %872 = vmatprep.subr.mxu0 0.0
    %873 = vmatpush2.msra.mxu0 0.0
    %874 = vmatprep.subr.mxu0 0.0
    %875 = vmatpush2.msra.mxu0 0.0
    %876 = vmatprep.subr.mxu0 0.0
    %877 = vmatpush2.msra.mxu0 0.0
    %878 = vmatprep.subr.mxu0 0.0
    %879 = vmatpush2.msra.mxu0 0.0
    %880 = vmatprep.subr.mxu0 0.0
    %881 = vmatpush2.msra.mxu0 0.0
    %882 = vmatprep.subr.mxu0 0.0
    %883 = vmatpush2.msra.mxu0 0.0
    %884 = vmatprep.subr.mxu0 0.0
    %885 = vmatpush2.msra.mxu0 0.0
    %886 = vmatprep.subr.mxu0 0.0
    %887 = vmatpush2.msra.mxu0 0.0
    %888 = vmatprep.subr.mxu0 0.0
    %889 = vmatpush2.msra.mxu0 0.0
    %890 = vmatprep.subr.mxu0 0.0
    %891 = vmatpush2.msra.mxu0 0.0
    %892 = vmatprep.subr.mxu0 0.0
    %893 = vmatpush2.msra.mxu0 0.0
    %894 = vmatprep.subr.mxu0 0.0
    %895 = vmatpush2.msra.mxu0 0.0
    %896 = vmatprep.subr.mxu0 0.0
    %897 = vmatpush2.msra.mxu0 0.0
    %898 = vmatprep.subr.mxu0 0.0
    %899 = vmatpush2.msra.mxu0 0.0
    %900 = vmatprep.mubr.f32.mxu0 0.0
    %901 = vmatmul.mubr.f32.gmra.mxu0 %v834
    %v902 = vpop.f32.mrf.mxu0
    %v903 = vadd.f32 0.0, %v902
    %v904 = vpop.f32.mrf.mxu0
    %905 = vdwg.mxu0
    %v906 = vadd.f32 %v830, %v903
    %v907 = vtanh.pop %v906
    %v908 = vmul.f32 %v907, 0.5
    %v909 = vadd.f32 %v908, 0.5
    %v910 = vsel %vm230, %v907, %v909
    %v911 = vmul.f32 %v910, %v822
    %913 = vrot.lane.b32.xlu0 %v910, 64
    %v914 = vpop.permute.xlu0 %913
    %v916 = vmul.f32 %v910, %v914
    %918 = vrot.lane.b32.xlu0 %v916, 32
    %v919 = vpop.permute.xlu0 %918
    %v921 = vadd.f32 %v911, %v919
    %v922 = vtanh.pop %v921
    %924 = vrot.lane.b32.xlu0 %v922, 64
    %v925 = vpop.permute.xlu0 %924
    %v927 = vmul.f32 %v910, %v925
    %s928 = scalar_lea.vmem [#allocation2], 56
    %v929 = vld [vmem:[%s928] sm:$0xff]
    %931 = vrot.lane.b32.xlu0 %v927, 32
    %v932 = vpop.permute.xlu0 %931
    %v933 = vsel %vm234, %v932, 0
    %935 = vmatprep.subr.mxu0 0.0
    %936 = vmatpush1.msra.mxu0 0.0
    %937 = vmatprep.subr.mxu0 0.0
    %938 = vmatpush1.msra.mxu0 0.0
    %939 = vmatprep.subr.mxu0 0.0
    %940 = vmatpush1.msra.mxu0 0.0
    %941 = vmatprep.subr.mxu0 0.0
    %942 = vmatpush1.msra.mxu0 0.0
    %943 = vmatprep.subr.mxu0 0.0
    %944 = vmatpush1.msra.mxu0 0.0
    %945 = vmatprep.subr.mxu0 0.0
    %946 = vmatpush1.msra.mxu0 0.0
    %947 = vmatprep.subr.mxu0 0.0
    %948 = vmatpush1.msra.mxu0 0.0
    %949 = vmatprep.subr.mxu0 0.0
    %950 = vmatpush1.msra.mxu0 0.0
    %951 = vmatprep.subr.mxu0 0.0
    %952 = vmatpush1.msra.mxu0 0.0
    %953 = vmatprep.subr.mxu0 0.0
    %954 = vmatpush1.msra.mxu0 0.0
    %955 = vmatprep.subr.mxu0 0.0
    %956 = vmatpush1.msra.mxu0 0.0
    %957 = vmatprep.subr.mxu0 0.0
    %958 = vmatpush1.msra.mxu0 0.0
    %959 = vmatprep.subr.mxu0 0.0
    %960 = vmatpush1.msra.mxu0 %v227
    %961 = vmatprep.subr.mxu0 0.0
    %962 = vmatpush1.msra.mxu0 %v226
    %963 = vmatprep.subr.mxu0 0.0
    %964 = vmatpush1.msra.mxu0 %v225
    %965 = vmatprep.subr.mxu0 0.0
    %966 = vmatpush1.msra.mxu0 %v224
    %967 = vmatprep.subr.mxu0 0.0
    %968 = vmatpush2.msra.mxu0 0.0
    %969 = vmatprep.subr.mxu0 0.0
    %970 = vmatpush2.msra.mxu0 0.0
    %971 = vmatprep.subr.mxu0 0.0
    %972 = vmatpush2.msra.mxu0 0.0
    %973 = vmatprep.subr.mxu0 0.0
    %974 = vmatpush2.msra.mxu0 0.0
    %975 = vmatprep.subr.mxu0 0.0
    %976 = vmatpush2.msra.mxu0 0.0
    %977 = vmatprep.subr.mxu0 0.0
    %978 = vmatpush2.msra.mxu0 0.0
    %979 = vmatprep.subr.mxu0 0.0
    %980 = vmatpush2.msra.mxu0 0.0
    %981 = vmatprep.subr.mxu0 0.0
    %982 = vmatpush2.msra.mxu0 0.0
    %983 = vmatprep.subr.mxu0 0.0
    %984 = vmatpush2.msra.mxu0 0.0
    %985 = vmatprep.subr.mxu0 0.0
    %986 = vmatpush2.msra.mxu0 0.0
    %987 = vmatprep.subr.mxu0 0.0
    %988 = vmatpush2.msra.mxu0 0.0
    %989 = vmatprep.subr.mxu0 0.0
    %990 = vmatpush2.msra.mxu0 0.0
    %991 = vmatprep.subr.mxu0 0.0
    %992 = vmatpush2.msra.mxu0 0.0
    %993 = vmatprep.subr.mxu0 0.0
    %994 = vmatpush2.msra.mxu0 0.0
    %995 = vmatprep.subr.mxu0 0.0
    %996 = vmatpush2.msra.mxu0 0.0
    %997 = vmatprep.subr.mxu0 0.0
    %998 = vmatpush2.msra.mxu0 0.0
    %999 = vmatprep.mubr.f32.mxu0 0.0
    %1000 = vmatmul.mubr.f32.gmra.mxu0 %v933
    %v1001 = vpop.f32.mrf.mxu0
    %v1002 = vadd.f32 0.0, %v1001
    %v1003 = vpop.f32.mrf.mxu0
    %1004 = vdwg.mxu0
    %v1005 = vadd.f32 %v929, %v1002
    %v1006 = vtanh.pop %v1005
    %v1007 = vmul.f32 %v1006, 0.5
    %v1008 = vadd.f32 %v1007, 0.5
    %v1009 = vsel %vm230, %v1006, %v1008
    %v1010 = vmul.f32 %v1009, %v921
    %1012 = vrot.lane.b32.xlu0 %v1009, 64
    %v1013 = vpop.permute.xlu0 %1012
    %v1015 = vmul.f32 %v1009, %v1013
    %1017 = vrot.lane.b32.xlu0 %v1015, 32
    %v1018 = vpop.permute.xlu0 %1017
    %v1020 = vadd.f32 %v1010, %v1018
    %v1021 = vtanh.pop %v1020
    %1023 = vrot.lane.b32.xlu0 %v1021, 64
    %v1024 = vpop.permute.xlu0 %1023
    %v1026 = vmul.f32 %v1009, %v1024
    %1028 = vrot.lane.b32.xlu0 %v1026, 32
    %v1029 = vpop.permute.xlu0 %1028
    %1031 = vst.msk [vmem:[#allocation3] sm:$0xff] %vm234, %v1029
    %1033 = vrot.lane.b32.xlu0 %v1020, 96
    %v1034 = vpop.permute.xlu0 %1033
    %1036 = vst.msk [vmem:[#allocation4] sm:$0xff] %vm234, %v1034
    // Predicated region
    $region22: #{encoder_final_hidden.1} parent=1 // pred_check
      %p1037 = pneg %p30
    $region23: #{encoder_final_hidden.1} parent=1 // pred_check_branch
      %1039 = sbr.rel (%p1037) target = $region25
    $region24: #{encoder_final_hidden.1} parent=1 // pred_region
      %v1040 = vld [vmem:[#allocation3] sm:$0xff]
      %1041 = vst.msk [vmem:[%s3] sm:$0xff] %vm234, %v1040
      %v1042 = vld [vmem:[#allocation4] sm:$0xff]
      %1043 = vst.msk [vmem:[%s4] sm:$0xff] %vm234, %v1042
    $region25: #{encoder_final_hidden.1} parent=1 // pred_fallthru
      _
    // Predicated region
    $region26: #{encoder_final_hidden.1} parent=1 // pred_check
      _
    $region27: #{encoder_final_hidden.1} parent=1 // pred_check_branch
      %1045 = sbr.rel (0) target = $region29
    $region28: #{encoder_final_hidden.1} parent=1 // pred_region
      _
    $region29: #{encoder_final_hidden.1} parent=1 // pred_fallthru
      _
    // Predicated region
    $region30: #{encoder_final_hidden.1} parent=1 // pred_check
      _
    $region31: #{encoder_final_hidden.1} parent=1 // pred_check_branch
      %1047 = sbr.rel (0) target = $region33
    $region32: #{encoder_final_hidden.1} parent=1 // pred_region
      _
    $region33: #{encoder_final_hidden.1} parent=1 // pred_fallthru
      _
    // Predicated region
    $region34: #{encoder_final_hidden.1} parent=1 // pred_check
      _
    $region35: #{encoder_final_hidden.1} parent=1 // pred_check_branch
      %1049 = sbr.rel (0) target = $region37
    $region36: #{encoder_final_hidden.1} parent=1 // pred_region
      _
    $region37: #{encoder_final_hidden.1} parent=1 // pred_fallthru
      _
    // Predicated region
    $region38: #{encoder_final_hidden.1} parent=1 // pred_check
      _
    $region39: #{encoder_final_hidden.1} parent=1 // pred_check_branch
      %1051 = sbr.rel (0) target = $region41
    $region40: #{encoder_final_hidden.1} parent=1 // pred_region
      _
    $region41: #{encoder_final_hidden.1} parent=1 // pred_fallthru
      _
    %1052 = vsyncpa [#allocation6], 1

</llo_original>
